<compile_context>
chip_gen: v7x
topology: tpu7x:2x2x1
jax: 0.10.0
libtpu: 0.0.40
codegen_flags: <defaults>
</compile_context>

<pallas_src>
import functools

import jax
import jax.numpy as jnp
from jax import lax
from jax.experimental import pallas as pl
from jax.experimental.pallas import tpu as pltpu


def _silu(z):
    # silu(z) = z * sigmoid(z) = 0.5 * z * (1 + tanh(z / 2))
    # one transcendental (EUP) op per element vs exp + reciprocal.
    return 0.5 * z * (1.0 + jnp.tanh(0.5 * z))


def _mlp_kernel(num_hidden_layers, chunk, compute_dtype,
                x_ref, w1a_ref, w1b_ref, b1_ref, wh_ref, bh_ref, wl_ref,
                bl_ref, o_ref):
    """Whole MLP for one lane-dense tile of samples; all weights in VMEM.

    x_ref : (2, tile_n)  transposed inputs (features on sublanes, samples on lanes)
    w1a/w1b: (H, 1)      fc1 weight columns (input features 0 / 1)
    b1    : (H, 1)
    wh    : (L, H, H)    hidden weights, PyTorch (out, in) layout
    bh    : (L, H, 1)
    wl    : (H, 1)       fcLast weight (transposed)
    bl    : (1, 1)
    o_ref : (1, tile_n)  lane-dense output tile
    """
    tile_n = x_ref.shape[1]
    num_chunks = tile_n // chunk

    # Hoist weight/bias loads (and optional bf16 cast) out of the chunk loop:
    # loaded once per grid step instead of once per chunk.
    w1a = w1a_ref[...]
    w1b = w1b_ref[...]
    b1 = b1_ref[...]
    whs = [wh_ref[i].astype(compute_dtype) for i in range(num_hidden_layers)]
    bhs = [bh_ref[i] for i in range(num_hidden_layers)]
    wl = wl_ref[...]
    bl = bl_ref[...]

    def chunk_body(c, carry):
        start = pl.multiple_of(c * chunk, chunk)
        xc = x_ref[:, pl.ds(start, chunk)]                       # (2, chunk)

        # fc1: contraction dim is only 2 -> two VPU broadcast FMAs (no MXU).
        h = w1a * xc[0:1, :] + w1b * xc[1:2, :] + b1              # (H, chunk)
        h = _silu(h).astype(compute_dtype)

        # Hidden layers: W_i @ h + b_i, lane-dense (H, chunk) every layer.
        # num_hidden_layers is compile-time -> static unrolled loop.
        for i in range(num_hidden_layers):
            z = jnp.dot(whs[i], h,
                        preferred_element_type=jnp.float32) + bhs[i]
            h = _silu(z).astype(compute_dtype)

        # fcLast: single output feature -> elementwise multiply + sublane
        # (XLU) reduce instead of a 1-column MXU matmul.
        out = (jnp.sum(wl * h.astype(jnp.float32), axis=0, keepdims=True)
               + bl)                                             # (1, chunk)
        o_ref[:, pl.ds(start, chunk)] = out.astype(o_ref.dtype)
        return carry

    # Static trip count; unroll=True keeps the LLO scheduler's view flat.
    lax.fori_loop(0, num_chunks, chunk_body, 0, unroll=True)


def _round_up(a, b):
    return -(-a // b) * b


def _choose_tiling(n, chunk, max_tile):
    """Pick (tile_n, num_tiles): few big grid steps; even tile count if split."""
    max_tile = _round_up(max_tile, chunk)
    n_chunked = _round_up(n, chunk)
    if n_chunked <= max_tile:
        return n_chunked, 1            # single grid step, no megacore split
    num_tiles = -(-n_chunked // max_tile)
    if num_tiles % 2:
        num_tiles += 1                 # even tile count balances v7x's 2 TCs
    tile_n = _round_up(-(-n // num_tiles), chunk)
    return tile_n, num_tiles


def fitter_forward(xT, params, *, chunk=256, max_tile=4096,
                   compute_dtype=jnp.float32):
    """xT: (2, N) float32, samples already on the lane (last) axis.

    Returns (N, 1) float32.  compute_dtype=jnp.bfloat16 is an optional
    activation dtype for the VPU/EUP silu path on v6e/v7x (keep float32 on
    v5e and for precision-sensitive PINN gradients).
    """
    assert chunk % 128 == 0, "chunk must be lane-dense (multiple of 128)"
    w1, b1, wh, bh, wl, bl = (params["w1"], params["b1"], params["wh"],
                              params["bh"], params["wl"], params["bl"])
    in_dim, N = xT.shape
    assert in_dim == 2
    L, H, _ = wh.shape

    tile_n, num_tiles = _choose_tiling(N, chunk, max_tile)
    Np = tile_n * num_tiles
    if Np != N:
        xT = jnp.pad(xT, ((0, 0), (0, Np - N)))   # zero-pad tail, sliced off

    # fc1 weight columns pre-split in the wrapper (keeps the kernel free of
    # lane-offset slicing of a 2-wide array).
    w1a = w1[:, 0:1]                               # (H, 1)
    w1b = w1[:, 1:2]                               # (H, 1)

    # Advisory cost estimate for XLA's scheduler (forward pass typically sits
    # inside a larger PINN training step).
    flops = 2 * Np * (2 * H + L * H * H + H)
    transcendentals = Np * H * (L + 1)             # one tanh per silu element
    bytes_accessed = 4 * (xT.size + Np + w1.size + b1.size + wh.size
                          + bh.size + wl.size + bl.size)

    # Single tile -> no point splitting across v7x TensorCores ("arbitrary");
    # multiple tiles -> "parallel" with an even tile count.
    semantics = ("arbitrary",) if num_tiles == 1 else ("parallel",)

    kernel = functools.partial(_mlp_kernel, L, chunk, compute_dtype)

    def build(single_buffer_weights):
        def wspec(shape):
            nd = len(shape)
            imap = lambda i, _n=nd: (0,) * _n
            if single_buffer_weights:
                # Constant-index blocks revisited every step: one buffer is
                # enough (saves the redundant second VMEM copy).
                return pl.BlockSpec(shape, imap, pipeline_mode=pl.Buffered(1))
            return pl.BlockSpec(shape, imap)

        return pl.pallas_call(
            kernel,
            out_shape=jax.ShapeDtypeStruct((1, Np), jnp.float32),
            grid_spec=pltpu.PrefetchScalarGridSpec(
                num_scalar_prefetch=0,
                grid=(num_tiles,),
                in_specs=[
                    pl.BlockSpec((in_dim, tile_n), lambda i: (0, i)),  # x^T
                    wspec((H, 1)),       # w1 col 0
                    wspec((H, 1)),       # w1 col 1
                    wspec((H, 1)),       # b1
                    wspec((L, H, H)),    # hidden W
                    wspec((L, H, 1)),    # hidden b
                    wspec((H, 1)),       # wLast^T
                    wspec((1, 1)),       # bLast
                ],
                out_specs=pl.BlockSpec((1, tile_n), lambda i: (0, i)),
            ),
            compiler_params=pltpu.CompilerParams(
                dimension_semantics=semantics),
            cost_estimate=pl.CostEstimate(flops=flops,
                                          transcendentals=transcendentals,
                                          bytes_accessed=bytes_accessed),
        )

    args = (xT, w1a, w1b, b1, wh, bh, wl, bl)
    try:
        out = build(True)(*args)
    except Exception:
        # Fallback for jax versions without BlockSpec(pipeline_mode=Buffered).
        out = build(False)(*args)

    return out[0, :N].reshape(N, 1)


def init_params(key, num_hidden_nodes, num_hidden_layers):
    """Deterministic PyTorch-Linear-style (uniform +-1/sqrt(fan_in)) init."""
    H, L = num_hidden_nodes, num_hidden_layers
    ks = jax.random.split(key, 8)

    def uni(k, shape, fan_in):
        bound = 1.0 / jnp.sqrt(jnp.float32(fan_in))
        return jax.random.uniform(k, shape, jnp.float32, -bound, bound)

    params = {
        "w1": uni(ks[0], (H, 2), 2),            # fc1.weight, (out, in)
        "b1": uni(ks[1], (H, 1), 2),            # fc1.bias as column
        "wh": uni(ks[2], (L, H, H), H),         # fcs[i].weight, (out, in)
        "bh": uni(ks[3], (L, H, 1), H),         # fcs[i].bias as column
        "wl": uni(ks[4], (H, 1), H),            # fcLast.weight transposed
        "bl": uni(ks[5], (1, 1), H),            # fcLast.bias
        # Present in the module but unused in forward():
        "lambda1": jax.random.uniform(ks[6], (1,), jnp.float32),
        "lambda2": jax.random.uniform(ks[7], (1,), jnp.float32),
    }
    return params


def fitter_reference(x, params):
    """Pure-JAX reference of the same forward pass (row-major (N, 2) input)."""
    h = x @ params["w1"].T + params["b1"][:, 0]
    h = h * jax.nn.sigmoid(h)
    L = params["wh"].shape[0]
    for i in range(L):
        z = h @ params["wh"][i].T + params["bh"][i, :, 0]
        h = z * jax.nn.sigmoid(z)
    return h @ params["wl"] + params["bl"][0]


if __name__ == "__main__":
    key = jax.random.PRNGKey(0)
    k_param, k_x1, k_t1, k_x2, k_t2, k_x3, k_t3 = jax.random.split(key, 7)

    num_hidden_nodes = 32
    num_hidden_layers = 2
    params = init_params(k_param, num_hidden_nodes, num_hidden_layers)

    def make_inputs(kx, kt, n):
        # Burgers-PINN collocation points generated directly in lane-major
        # (2, N) layout -> no per-call transpose in the wrapper.
        xs = jax.random.uniform(kx, (1, n), jnp.float32, -1.0, 1.0)
        ts = jax.random.uniform(kt, (1, n), jnp.float32, 0.0, 1.0)
        return jnp.concatenate([xs, ts], axis=0)          # (2, N)

    def check(inpT):
        n = inpT.shape[1]
        out = jax.block_until_ready(fitter_forward(inpT, params))
        ref = fitter_reference(inpT.T, params)
        assert out.shape == (n, 1)
        assert jnp.allclose(out, ref, atol=5e-5, rtol=1e-4), "mismatch vs ref"

    # 1) Tiny case: single grid step, single chunk ("arbitrary" semantics).
    check(make_inputs(k_x1, k_t1, 256))

    # 2) Padding + multi-chunk loop inside one grid step.
    check(make_inputs(k_x2, k_t2, 1000))

    # 3) Multi-tile "parallel" grid path (even tile count) via a smaller
    #    max_tile so the test stays small.
    inpT3 = make_inputs(k_x3, k_t3, 3000)
    out3 = jax.block_until_ready(fitter_forward(inpT3, params, max_tile=1024))
    ref3 = fitter_reference(inpT3.T, params)
    assert out3.shape == (3000, 1)
    assert jnp.allclose(out3, ref3, atol=5e-5, rtol=1e-4), "mismatch vs ref"

    print("KERNEL_OK")
</pallas_src>

<mosaic_0001>
module attributes {stable_mosaic.version = 11 : i64} {
  func.func @_mlp_kernel(%arg0: i32, %arg1: memref<2x256xf32, #tpu.memory_space<vmem>>, %arg2: memref<32x1xf32, #tpu.memory_space<vmem>>, %arg3: memref<32x1xf32, #tpu.memory_space<vmem>>, %arg4: memref<32x1xf32, #tpu.memory_space<vmem>>, %arg5: memref<2x32x32xf32, #tpu.memory_space<vmem>>, %arg6: memref<2x32x1xf32, #tpu.memory_space<vmem>>, %arg7: memref<32x1xf32, #tpu.memory_space<vmem>>, %arg8: memref<1x1xf32, #tpu.memory_space<vmem>>, %arg9: memref<1x256xf32, #tpu.memory_space<vmem>>) attributes {dimension_semantics = [#tpu.dimension_semantics<arbitrary>], iteration_bounds = array<i64: 1>, scalar_prefetch = 0 : i64, scratch_operands = 0 : i64, tpu.core_type = #tpu.core_type<tc>, window_params = [{transform_indices = @transform_0, window_bounds = array<i64: 2, 256>}, {pipeline_mode = #tpu.pipeline_mode<synchronous>, transform_indices = @transform_1, window_bounds = array<i64: 32, 1>}, {pipeline_mode = #tpu.pipeline_mode<synchronous>, transform_indices = @transform_2, window_bounds = array<i64: 32, 1>}, {pipeline_mode = #tpu.pipeline_mode<synchronous>, transform_indices = @transform_3, window_bounds = array<i64: 32, 1>}, {pipeline_mode = #tpu.pipeline_mode<synchronous>, transform_indices = @transform_4, window_bounds = array<i64: 2, 32, 32>}, {pipeline_mode = #tpu.pipeline_mode<synchronous>, transform_indices = @transform_5, window_bounds = array<i64: 2, 32, 1>}, {pipeline_mode = #tpu.pipeline_mode<synchronous>, transform_indices = @transform_6, window_bounds = array<i64: 32, 1>}, {pipeline_mode = #tpu.pipeline_mode<synchronous>, transform_indices = @transform_7, window_bounds = array<i64: 1, 1>}, {transform_indices = @transform_8, window_bounds = array<i64: 1, 256>}]} {
    %c0 = arith.constant 0 : index
    %c0_0 = arith.constant 0 : index
    %0 = vector.load %arg2[%c0, %c0_0] : memref<32x1xf32, #tpu.memory_space<vmem>>, vector<32x1xf32>
    %c0_1 = arith.constant 0 : index
    %c0_2 = arith.constant 0 : index
    %1 = vector.load %arg3[%c0_1, %c0_2] : memref<32x1xf32, #tpu.memory_space<vmem>>, vector<32x1xf32>
    %c0_3 = arith.constant 0 : index
    %c0_4 = arith.constant 0 : index
    %2 = vector.load %arg4[%c0_3, %c0_4] : memref<32x1xf32, #tpu.memory_space<vmem>>, vector<32x1xf32>
    %c0_5 = arith.constant 0 : index
    %c0_6 = arith.constant 0 : index
    %c0_7 = arith.constant 0 : index
    %3 = vector.load %arg5[%c0_5, %c0_6, %c0_7] : memref<2x32x32xf32, #tpu.memory_space<vmem>>, vector<1x32x32xf32>
    %4 = vector.shape_cast %3 : vector<1x32x32xf32> to vector<32x32xf32>
    %c1 = arith.constant 1 : index
    %c0_8 = arith.constant 0 : index
    %c0_9 = arith.constant 0 : index
    %5 = vector.load %arg5[%c1, %c0_8, %c0_9] : memref<2x32x32xf32, #tpu.memory_space<vmem>>, vector<1x32x32xf32>
    %6 = vector.shape_cast %5 : vector<1x32x32xf32> to vector<32x32xf32>
    %c0_10 = arith.constant 0 : index
    %c0_11 = arith.constant 0 : index
    %c0_12 = arith.constant 0 : index
    %7 = vector.load %arg6[%c0_10, %c0_11, %c0_12] : memref<2x32x1xf32, #tpu.memory_space<vmem>>, vector<1x32x1xf32>
    %8 = vector.shape_cast %7 : vector<1x32x1xf32> to vector<32x1xf32>
    %c1_13 = arith.constant 1 : index
    %c0_14 = arith.constant 0 : index
    %c0_15 = arith.constant 0 : index
    %9 = vector.load %arg6[%c1_13, %c0_14, %c0_15] : memref<2x32x1xf32, #tpu.memory_space<vmem>>, vector<1x32x1xf32>
    %10 = vector.shape_cast %9 : vector<1x32x1xf32> to vector<32x1xf32>
    %c0_16 = arith.constant 0 : index
    %c0_17 = arith.constant 0 : index
    %11 = vector.load %arg7[%c0_16, %c0_17] : memref<32x1xf32, #tpu.memory_space<vmem>>, vector<32x1xf32>
    %c0_18 = arith.constant 0 : index
    %c0_19 = arith.constant 0 : index
    %12 = vector.load %arg8[%c0_18, %c0_19] : memref<1x1xf32, #tpu.memory_space<vmem>>, vector<1x1xf32>
    %c0_i32 = arith.constant 0 : i32
    %c256_i32 = arith.constant 256 : i32
    %13 = arith.muli %c0_i32, %c256_i32 : i32
    %14 = tpu.assume_multiple %13, 256 : i32
    %c0_20 = arith.constant 0 : index
    %15 = arith.index_cast %14 : i32 to index
    %16 = vector.load %arg1[%c0_20, %15] : memref<2x256xf32, #tpu.memory_space<vmem>>, vector<2x256xf32>
    %17 = vector.extract_strided_slice %16 {offsets = [0, 0], sizes = [1, 256], strides = [1, 1]} : vector<2x256xf32> to vector<1x256xf32>
    %18 = vector.broadcast %0 : vector<32x1xf32> to vector<32x256xf32>
    %19 = vector.broadcast %17 : vector<1x256xf32> to vector<32x256xf32>
    %20 = arith.mulf %18, %19 : vector<32x256xf32>
    %21 = vector.extract_strided_slice %16 {offsets = [1, 0], sizes = [1, 256], strides = [1, 1]} : vector<2x256xf32> to vector<1x256xf32>
    %22 = vector.broadcast %1 : vector<32x1xf32> to vector<32x256xf32>
    %23 = vector.broadcast %21 : vector<1x256xf32> to vector<32x256xf32>
    %24 = arith.mulf %22, %23 : vector<32x256xf32>
    %25 = arith.addf %20, %24 : vector<32x256xf32>
    %26 = vector.broadcast %2 : vector<32x1xf32> to vector<32x256xf32>
    %27 = arith.addf %25, %26 : vector<32x256xf32>
    %cst = arith.constant 5.000000e-01 : f32
    %28 = vector.broadcast %cst : f32 to vector<32x256xf32>
    %29 = arith.mulf %28, %27 : vector<32x256xf32>
    %cst_21 = arith.constant 5.000000e-01 : f32
    %30 = vector.broadcast %cst_21 : f32 to vector<32x256xf32>
    %31 = arith.mulf %30, %27 : vector<32x256xf32>
    %32 = math.tanh %31 : vector<32x256xf32>
    %cst_22 = arith.constant 1.000000e+00 : f32
    %33 = vector.broadcast %cst_22 : f32 to vector<32x256xf32>
    %34 = arith.addf %33, %32 : vector<32x256xf32>
    %35 = arith.mulf %29, %34 : vector<32x256xf32>
    %cst_23 = arith.constant dense<0.000000e+00> : vector<32x256xf32>
    %36 = tpu.matmul %4, %35, %cst_23 {dimension_numbers = #tpu.dot_dimension_numbers<[1], [0], [0], [1], [0, 0, 1, 1], [], []>} : vector<32x32xf32>, vector<32x256xf32>, vector<32x256xf32> -> vector<32x256xf32>
    %37 = vector.broadcast %8 : vector<32x1xf32> to vector<32x256xf32>
    %38 = arith.addf %36, %37 : vector<32x256xf32>
    %cst_24 = arith.constant 5.000000e-01 : f32
    %39 = vector.broadcast %cst_24 : f32 to vector<32x256xf32>
    %40 = arith.mulf %39, %38 : vector<32x256xf32>
    %cst_25 = arith.constant 5.000000e-01 : f32
    %41 = vector.broadcast %cst_25 : f32 to vector<32x256xf32>
    %42 = arith.mulf %41, %38 : vector<32x256xf32>
    %43 = math.tanh %42 : vector<32x256xf32>
    %cst_26 = arith.constant 1.000000e+00 : f32
    %44 = vector.broadcast %cst_26 : f32 to vector<32x256xf32>
    %45 = arith.addf %44, %43 : vector<32x256xf32>
    %46 = arith.mulf %40, %45 : vector<32x256xf32>
    %cst_27 = arith.constant dense<0.000000e+00> : vector<32x256xf32>
    %47 = tpu.matmul %6, %46, %cst_27 {dimension_numbers = #tpu.dot_dimension_numbers<[1], [0], [0], [1], [0, 0, 1, 1], [], []>} : vector<32x32xf32>, vector<32x256xf32>, vector<32x256xf32> -> vector<32x256xf32>
    %48 = vector.broadcast %10 : vector<32x1xf32> to vector<32x256xf32>
    %49 = arith.addf %47, %48 : vector<32x256xf32>
    %cst_28 = arith.constant 5.000000e-01 : f32
    %50 = vector.broadcast %cst_28 : f32 to vector<32x256xf32>
    %51 = arith.mulf %50, %49 : vector<32x256xf32>
    %cst_29 = arith.constant 5.000000e-01 : f32
    %52 = vector.broadcast %cst_29 : f32 to vector<32x256xf32>
    %53 = arith.mulf %52, %49 : vector<32x256xf32>
    %54 = math.tanh %53 : vector<32x256xf32>
    %cst_30 = arith.constant 1.000000e+00 : f32
    %55 = vector.broadcast %cst_30 : f32 to vector<32x256xf32>
    %56 = arith.addf %55, %54 : vector<32x256xf32>
    %57 = arith.mulf %51, %56 : vector<32x256xf32>
    %58 = vector.broadcast %11 : vector<32x1xf32> to vector<32x256xf32>
    %59 = arith.mulf %58, %57 : vector<32x256xf32>
    %cst_31 = arith.constant dense<0.000000e+00> : vector<256xf32>
    %60 = vector.multi_reduction <add>, %59, %cst_31 [0] : vector<32x256xf32> to vector<256xf32>
    %61 = vector.shape_cast %60 : vector<256xf32> to vector<1x256xf32>
    %62 = vector.broadcast %12 : vector<1x1xf32> to vector<1x256xf32>
    %63 = arith.addf %61, %62 : vector<1x256xf32>
    %c0_32 = arith.constant 0 : index
    %64 = arith.index_cast %14 : i32 to index
    %65 = vector.load %arg9[%c0_32, %64] : memref<1x256xf32, #tpu.memory_space<vmem>>, vector<1x256xf32>
    tpu.vector_store %arg9[%c0_32, %64], %63 {strides = array<i32>} : memref<1x256xf32, #tpu.memory_space<vmem>>, vector<1x256xf32>,
    %c1_i32 = arith.constant 1 : i32
    return
  }
  func.func @transform_0(%arg0: i32) -> (i32, i32) {
    %c0_i32 = arith.constant 0 : i32
    %c0_i32_0 = arith.constant 0 : i32
    return %c0_i32, %arg0 : i32, i32
  }
  func.func @transform_1(%arg0: i32) -> (i32, i32) {
    %c0_i32 = arith.constant 0 : i32
    %c0_i32_0 = arith.constant 0 : i32
    %c0_i32_1 = arith.constant 0 : i32
    return %c0_i32, %c0_i32_0 : i32, i32
  }
  func.func @transform_2(%arg0: i32) -> (i32, i32) {
    %c0_i32 = arith.constant 0 : i32
    %c0_i32_0 = arith.constant 0 : i32
    %c0_i32_1 = arith.constant 0 : i32
    return %c0_i32, %c0_i32_0 : i32, i32
  }
  func.func @transform_3(%arg0: i32) -> (i32, i32) {
    %c0_i32 = arith.constant 0 : i32
    %c0_i32_0 = arith.constant 0 : i32
    %c0_i32_1 = arith.constant 0 : i32
    return %c0_i32, %c0_i32_0 : i32, i32
  }
  func.func @transform_4(%arg0: i32) -> (i32, i32, i32) {
    %c0_i32 = arith.constant 0 : i32
    %c0_i32_0 = arith.constant 0 : i32
    %c0_i32_1 = arith.constant 0 : i32
    %c0_i32_2 = arith.constant 0 : i32
    return %c0_i32, %c0_i32_0, %c0_i32_1 : i32, i32, i32
  }
  func.func @transform_5(%arg0: i32) -> (i32, i32, i32) {
    %c0_i32 = arith.constant 0 : i32
    %c0_i32_0 = arith.constant 0 : i32
    %c0_i32_1 = arith.constant 0 : i32
    %c0_i32_2 = arith.constant 0 : i32
    return %c0_i32, %c0_i32_0, %c0_i32_1 : i32, i32, i32
  }
  func.func @transform_6(%arg0: i32) -> (i32, i32) {
    %c0_i32 = arith.constant 0 : i32
    %c0_i32_0 = arith.constant 0 : i32
    %c0_i32_1 = arith.constant 0 : i32
    return %c0_i32, %c0_i32_0 : i32, i32
  }
  func.func @transform_7(%arg0: i32) -> (i32, i32) {
    %c0_i32 = arith.constant 0 : i32
    %c0_i32_0 = arith.constant 0 : i32
    %c0_i32_1 = arith.constant 0 : i32
    return %c0_i32, %c0_i32_0 : i32, i32
  }
  func.func @transform_8(%arg0: i32) -> (i32, i32) {
    %c0_i32 = arith.constant 0 : i32
    %c0_i32_0 = arith.constant 0 : i32
    return %c0_i32, %arg0 : i32, i32
  }
}

module attributes {stable_mosaic.version = 11 : i64} {
  func.func @_mlp_kernel(%arg0: i32, %arg1: memref<2x256xf32, #tpu.memory_space<vmem>>, %arg2: memref<32x1xf32, #tpu.memory_space<vmem>>, %arg3: memref<32x1xf32, #tpu.memory_space<vmem>>, %arg4: memref<32x1xf32, #tpu.memory_space<vmem>>, %arg5: memref<2x32x32xf32, #tpu.memory_space<vmem>>, %arg6: memref<2x32x1xf32, #tpu.memory_space<vmem>>, %arg7: memref<32x1xf32, #tpu.memory_space<vmem>>, %arg8: memref<1x1xf32, #tpu.memory_space<vmem>>, %arg9: memref<1x256xf32, #tpu.memory_space<vmem>>) attributes {dimension_semantics = [#tpu.dimension_semantics<arbitrary>], iteration_bounds = array<i64: 1>, scalar_prefetch = 0 : i64, scratch_operands = 0 : i64, tpu.core_type = #tpu.core_type<tc>, window_params = [{transform_indices = @transform_0, window_bounds = array<i64: 2, 256>}, {pipeline_mode = #tpu.pipeline_mode<synchronous>, transform_indices = @transform_1, window_bounds = array<i64: 32, 1>}, {pipeline_mode = #tpu.pipeline_mode<synchronous>, transform_indices = @transform_2, window_bounds = array<i64: 32, 1>}, {pipeline_mode = #tpu.pipeline_mode<synchronous>, transform_indices = @transform_3, window_bounds = array<i64: 32, 1>}, {pipeline_mode = #tpu.pipeline_mode<synchronous>, transform_indices = @transform_4, window_bounds = array<i64: 2, 32, 32>}, {pipeline_mode = #tpu.pipeline_mode<synchronous>, transform_indices = @transform_5, window_bounds = array<i64: 2, 32, 1>}, {pipeline_mode = #tpu.pipeline_mode<synchronous>, transform_indices = @transform_6, window_bounds = array<i64: 32, 1>}, {pipeline_mode = #tpu.pipeline_mode<synchronous>, transform_indices = @transform_7, window_bounds = array<i64: 1, 1>}, {transform_indices = @transform_8, window_bounds = array<i64: 1, 256>}]} {
    %c0 = arith.constant 0 : index
    %c0_0 = arith.constant 0 : index
    %0 = vector.load %arg2[%c0, %c0_0] : memref<32x1xf32, #tpu.memory_space<vmem>>, vector<32x1xf32>
    %c0_1 = arith.constant 0 : index
    %c0_2 = arith.constant 0 : index
    %1 = vector.load %arg3[%c0_1, %c0_2] : memref<32x1xf32, #tpu.memory_space<vmem>>, vector<32x1xf32>
    %c0_3 = arith.constant 0 : index
    %c0_4 = arith.constant 0 : index
    %2 = vector.load %arg4[%c0_3, %c0_4] : memref<32x1xf32, #tpu.memory_space<vmem>>, vector<32x1xf32>
    %c0_5 = arith.constant 0 : index
    %c0_6 = arith.constant 0 : index
    %c0_7 = arith.constant 0 : index
    %3 = vector.load %arg5[%c0_5, %c0_6, %c0_7] : memref<2x32x32xf32, #tpu.memory_space<vmem>>, vector<1x32x32xf32>
    %4 = vector.shape_cast %3 : vector<1x32x32xf32> to vector<32x32xf32>
    %c1 = arith.constant 1 : index
    %c0_8 = arith.constant 0 : index
    %c0_9 = arith.constant 0 : index
    %5 = vector.load %arg5[%c1, %c0_8, %c0_9] : memref<2x32x32xf32, #tpu.memory_space<vmem>>, vector<1x32x32xf32>
    %6 = vector.shape_cast %5 : vector<1x32x32xf32> to vector<32x32xf32>
    %c0_10 = arith.constant 0 : index
    %c0_11 = arith.constant 0 : index
    %c0_12 = arith.constant 0 : index
    %7 = vector.load %arg6[%c0_10, %c0_11, %c0_12] : memref<2x32x1xf32, #tpu.memory_space<vmem>>, vector<1x32x1xf32>
    %8 = vector.shape_cast %7 : vector<1x32x1xf32> to vector<32x1xf32>
    %c1_13 = arith.constant 1 : index
    %c0_14 = arith.constant 0 : index
    %c0_15 = arith.constant 0 : index
    %9 = vector.load %arg6[%c1_13, %c0_14, %c0_15] : memref<2x32x1xf32, #tpu.memory_space<vmem>>, vector<1x32x1xf32>
    %10 = vector.shape_cast %9 : vector<1x32x1xf32> to vector<32x1xf32>
    %c0_16 = arith.constant 0 : index
    %c0_17 = arith.constant 0 : index
    %11 = vector.load %arg7[%c0_16, %c0_17] : memref<32x1xf32, #tpu.memory_space<vmem>>, vector<32x1xf32>
    %c0_18 = arith.constant 0 : index
    %c0_19 = arith.constant 0 : index
    %12 = vector.load %arg8[%c0_18, %c0_19] : memref<1x1xf32, #tpu.memory_space<vmem>>, vector<1x1xf32>
    %c0_i32 = arith.constant 0 : i32
    %c256_i32 = arith.constant 256 : i32
    %13 = arith.muli %c0_i32, %c256_i32 : i32
    %14 = tpu.assume_multiple %13, 256 : i32
    %c0_20 = arith.constant 0 : index
    %15 = arith.index_cast %14 : i32 to index
    %16 = vector.load %arg1[%c0_20, %15] : memref<2x256xf32, #tpu.memory_space<vmem>>, vector<2x256xf32>
    %17 = vector.extract_strided_slice %16 {offsets = [0, 0], sizes = [1, 256], strides = [1, 1]} : vector<2x256xf32> to vector<1x256xf32>
    %18 = vector.broadcast %0 : vector<32x1xf32> to vector<32x256xf32>
    %19 = vector.broadcast %17 : vector<1x256xf32> to vector<32x256xf32>
    %20 = arith.mulf %18, %19 : vector<32x256xf32>
    %21 = vector.extract_strided_slice %16 {offsets = [1, 0], sizes = [1, 256], strides = [1, 1]} : vector<2x256xf32> to vector<1x256xf32>
    %22 = vector.broadcast %1 : vector<32x1xf32> to vector<32x256xf32>
    %23 = vector.broadcast %21 : vector<1x256xf32> to vector<32x256xf32>
    %24 = arith.mulf %22, %23 : vector<32x256xf32>
    %25 = arith.addf %20, %24 : vector<32x256xf32>
    %26 = vector.broadcast %2 : vector<32x1xf32> to vector<32x256xf32>
    %27 = arith.addf %25, %26 : vector<32x256xf32>
    %cst = arith.constant 5.000000e-01 : f32
    %28 = vector.broadcast %cst : f32 to vector<32x256xf32>
    %29 = arith.mulf %28, %27 : vector<32x256xf32>
    %cst_21 = arith.constant 5.000000e-01 : f32
    %30 = vector.broadcast %cst_21 : f32 to vector<32x256xf32>
    %31 = arith.mulf %30, %27 : vector<32x256xf32>
    %32 = math.tanh %31 : vector<32x256xf32>
    %cst_22 = arith.constant 1.000000e+00 : f32
    %33 = vector.broadcast %cst_22 : f32 to vector<32x256xf32>
    %34 = arith.addf %33, %32 : vector<32x256xf32>
    %35 = arith.mulf %29, %34 : vector<32x256xf32>
    %cst_23 = arith.constant dense<0.000000e+00> : vector<32x256xf32>
    %36 = tpu.matmul %4, %35, %cst_23 {dimension_numbers = #tpu.dot_dimension_numbers<[1], [0], [0], [1], [0, 0, 1, 1], [], []>} : vector<32x32xf32>, vector<32x256xf32>, vector<32x256xf32> -> vector<32x256xf32>
    %37 = vector.broadcast %8 : vector<32x1xf32> to vector<32x256xf32>
    %38 = arith.addf %36, %37 : vector<32x256xf32>
    %cst_24 = arith.constant 5.000000e-01 : f32
    %39 = vector.broadcast %cst_24 : f32 to vector<32x256xf32>
    %40 = arith.mulf %39, %38 : vector<32x256xf32>
    %cst_25 = arith.constant 5.000000e-01 : f32
    %41 = vector.broadcast %cst_25 : f32 to vector<32x256xf32>
    %42 = arith.mulf %41, %38 : vector<32x256xf32>
    %43 = math.tanh %42 : vector<32x256xf32>
    %cst_26 = arith.constant 1.000000e+00 : f32
    %44 = vector.broadcast %cst_26 : f32 to vector<32x256xf32>
    %45 = arith.addf %44, %43 : vector<32x256xf32>
    %46 = arith.mulf %40, %45 : vector<32x256xf32>
    %cst_27 = arith.constant dense<0.000000e+00> : vector<32x256xf32>
    %47 = tpu.matmul %6, %46, %cst_27 {dimension_numbers = #tpu.dot_dimension_numbers<[1], [0], [0], [1], [0, 0, 1, 1], [], []>} : vector<32x32xf32>, vector<32x256xf32>, vector<32x256xf32> -> vector<32x256xf32>
    %48 = vector.broadcast %10 : vector<32x1xf32> to vector<32x256xf32>
    %49 = arith.addf %47, %48 : vector<32x256xf32>
    %cst_28 = arith.constant 5.000000e-01 : f32
    %50 = vector.broadcast %cst_28 : f32 to vector<32x256xf32>
    %51 = arith.mulf %50, %49 : vector<32x256xf32>
    %cst_29 = arith.constant 5.000000e-01 : f32
    %52 = vector.broadcast %cst_29 : f32 to vector<32x256xf32>
    %53 = arith.mulf %52, %49 : vector<32x256xf32>
    %54 = math.tanh %53 : vector<32x256xf32>
    %cst_30 = arith.constant 1.000000e+00 : f32
    %55 = vector.broadcast %cst_30 : f32 to vector<32x256xf32>
    %56 = arith.addf %55, %54 : vector<32x256xf32>
    %57 = arith.mulf %51, %56 : vector<32x256xf32>
    %58 = vector.broadcast %11 : vector<32x1xf32> to vector<32x256xf32>
    %59 = arith.mulf %58, %57 : vector<32x256xf32>
    %cst_31 = arith.constant dense<0.000000e+00> : vector<256xf32>
    %60 = vector.multi_reduction <add>, %59, %cst_31 [0] : vector<32x256xf32> to vector<256xf32>
    %61 = vector.shape_cast %60 : vector<256xf32> to vector<1x256xf32>
    %62 = vector.broadcast %12 : vector<1x1xf32> to vector<1x256xf32>
    %63 = arith.addf %61, %62 : vector<1x256xf32>
    %c0_32 = arith.constant 0 : index
    %64 = arith.index_cast %14 : i32 to index
    %65 = vector.load %arg9[%c0_32, %64] : memref<1x256xf32, #tpu.memory_space<vmem>>, vector<1x256xf32>
    tpu.vector_store %arg9[%c0_32, %64], %63 {strides = array<i32>} : memref<1x256xf32, #tpu.memory_space<vmem>>, vector<1x256xf32>,
    %c1_i32 = arith.constant 1 : i32
    return
  }
  func.func @transform_0(%arg0: i32) -> (i32, i32) {
    %c0_i32 = arith.constant 0 : i32
    %c0_i32_0 = arith.constant 0 : i32
    return %c0_i32, %arg0 : i32, i32
  }
  func.func @transform_1(%arg0: i32) -> (i32, i32) {
    %c0_i32 = arith.constant 0 : i32
    %c0_i32_0 = arith.constant 0 : i32
    %c0_i32_1 = arith.constant 0 : i32
    return %c0_i32, %c0_i32_0 : i32, i32
  }
  func.func @transform_2(%arg0: i32) -> (i32, i32) {
    %c0_i32 = arith.constant 0 : i32
    %c0_i32_0 = arith.constant 0 : i32
    %c0_i32_1 = arith.constant 0 : i32
    return %c0_i32, %c0_i32_0 : i32, i32
  }
  func.func @transform_3(%arg0: i32) -> (i32, i32) {
    %c0_i32 = arith.constant 0 : i32
    %c0_i32_0 = arith.constant 0 : i32
    %c0_i32_1 = arith.constant 0 : i32
    return %c0_i32, %c0_i32_0 : i32, i32
  }
  func.func @transform_4(%arg0: i32) -> (i32, i32, i32) {
    %c0_i32 = arith.constant 0 : i32
    %c0_i32_0 = arith.constant 0 : i32
    %c0_i32_1 = arith.constant 0 : i32
    %c0_i32_2 = arith.constant 0 : i32
    return %c0_i32, %c0_i32_0, %c0_i32_1 : i32, i32, i32
  }
  func.func @transform_5(%arg0: i32) -> (i32, i32, i32) {
    %c0_i32 = arith.constant 0 : i32
    %c0_i32_0 = arith.constant 0 : i32
    %c0_i32_1 = arith.constant 0 : i32
    %c0_i32_2 = arith.constant 0 : i32
    return %c0_i32, %c0_i32_0, %c0_i32_1 : i32, i32, i32
  }
  func.func @transform_6(%arg0: i32) -> (i32, i32) {
    %c0_i32 = arith.constant 0 : i32
    %c0_i32_0 = arith.constant 0 : i32
    %c0_i32_1 = arith.constant 0 : i32
    return %c0_i32, %c0_i32_0 : i32, i32
  }
  func.func @transform_7(%arg0: i32) -> (i32, i32) {
    %c0_i32 = arith.constant 0 : i32
    %c0_i32_0 = arith.constant 0 : i32
    %c0_i32_1 = arith.constant 0 : i32
    return %c0_i32, %c0_i32_0 : i32, i32
  }
  func.func @transform_8(%arg0: i32) -> (i32, i32) {
    %c0_i32 = arith.constant 0 : i32
    %c0_i32_0 = arith.constant 0 : i32
    return %c0_i32, %arg0 : i32, i32
  }
}

</mosaic_0001>

<llo_original>
// kernel: tpu_custom_call.1
$region0: #{tpu_custom_call.1}
  #allocation0 [shape = 'u32[]', space=smem, size = 0x4, offset = 0x4, fixed_abs, tag = 'smem constant byte address 0x4 - core index']
  #allocation1 [shape = 'u32[144,128]{1,0:T(1,128)}', space=vmem, size = 0x12000, scoped, tag = 'internal scratch']
  #allocation2 [shape = 'f32[1,1]{1,0:T(1,128)S(1)}', space=vmem, size = 0x200, scoped, tag = 'scoped memory for tpu_custom_call.1']
  %s0 = inlined_call_operand.vmem [shape: f32[2,256], index: 0, kind: input, shape index: {}]
  %s1 = inlined_call_operand.vmem [shape: f32[32,1], index: 1, kind: input, shape index: {}]
  %s2 = inlined_call_operand.vmem [shape: f32[32,1], index: 2, kind: input, shape index: {}]
  %s3 = inlined_call_operand.vmem [shape: f32[32,1], index: 3, kind: input, shape index: {}]
  %s4 = inlined_call_operand.vmem [shape: f32[2,32,32], index: 4, kind: input, shape index: {}]
  %s5 = inlined_call_operand.vmem [shape: f32[2,32,1], index: 5, kind: input, shape index: {}]
  %s6 = inlined_call_operand.vmem [shape: f32[32,1], index: 6, kind: input, shape index: {}]
  %s7 = inlined_call_operand.<no memory space> [shape: f32[1,1], index: 7, kind: input, shape index: {}]
  %s8 = inlined_call_operand.hbm [shape: f32[1,256], index: 8, kind: output, shape index: {}]
  %s9 = sld [smem:[#allocation0]]
  $region42: #{tpu_custom_call.1} parent=0
    _
  %s11 = ssub.s32 1, %s9
  %s12 = scalar_select 0, %s11, %s9
  %v13 = vstv %s7
  %14 = vst [vmem:[#allocation2] sm:$0x1] %v13
  $region1: #{tpu_custom_call.1} parent=0
    #allocation3 [shape = 'u8[1024]{0}', space=vmem, size = 0x400, scoped, tag = 'output window, operand 0, single buffered']
    #allocation4 [shape = 's32[1]{0}', space=sflag, size = 0x4, scoped, tag = 'scoped memory for tpu_custom_call.1']
    %15 = vsyncpa [#allocation4], 0
    // Predicated region
    $region2: #{tpu_custom_call.1} parent=1 // pred_check
      _
    $region3: #{tpu_custom_call.1} parent=1 // pred_check_branch
      %17 = sbr.rel (0) target = $region5
    $region4: #{tpu_custom_call.1} parent=1 // pred_region
      _
    $region5: #{tpu_custom_call.1} parent=1 // pred_fallthru
      _
    // Predicated region
    $region6: #{tpu_custom_call.1} parent=1 // pred_check
      _
    $region7: #{tpu_custom_call.1} parent=1 // pred_check_branch
      %19 = sbr.rel (0) target = $region9
    $region8: #{tpu_custom_call.1} parent=1 // pred_region
      _
    $region9: #{tpu_custom_call.1} parent=1 // pred_fallthru
      _
    // Predicated region
    $region10: #{tpu_custom_call.1} parent=1 // pred_check
      _
    $region11: #{tpu_custom_call.1} parent=1 // pred_check_branch
      %21 = sbr.rel (0) target = $region13
    $region12: #{tpu_custom_call.1} parent=1 // pred_region
      _
    $region13: #{tpu_custom_call.1} parent=1 // pred_fallthru
      _
    // Predicated region
    $region14: #{tpu_custom_call.1} parent=1 // pred_check
      _
    $region15: #{tpu_custom_call.1} parent=1 // pred_check_branch
      %23 = sbr.rel (0) target = $region17
    $region16: #{tpu_custom_call.1} parent=1 // pred_region
      _
    $region17: #{tpu_custom_call.1} parent=1 // pred_fallthru
      _
    // Predicated region
    $region18: #{tpu_custom_call.1} parent=1 // pred_check
      _
    $region19: #{tpu_custom_call.1} parent=1 // pred_check_branch
      %25 = sbr.rel (0) target = $region21
    $region20: #{tpu_custom_call.1} parent=1 // pred_region
      _
    $region21: #{tpu_custom_call.1} parent=1 // pred_fallthru
      _
    // Predicated region
    $region22: #{tpu_custom_call.1} parent=1 // pred_check
      _
    $region23: #{tpu_custom_call.1} parent=1 // pred_check_branch
      %27 = sbr.rel (0) target = $region25
    $region24: #{tpu_custom_call.1} parent=1 // pred_region
      _
    $region25: #{tpu_custom_call.1} parent=1 // pred_fallthru
      _
    // Predicated region
    $region26: #{tpu_custom_call.1} parent=1 // pred_check
      _
    $region27: #{tpu_custom_call.1} parent=1 // pred_check_branch
      %29 = sbr.rel (0) target = $region29
    $region28: #{tpu_custom_call.1} parent=1 // pred_region
      _
    $region29: #{tpu_custom_call.1} parent=1 // pred_fallthru
      _
    // Predicated region
    $region30: #{tpu_custom_call.1} parent=1 // pred_check
      _
    $region31: #{tpu_custom_call.1} parent=1 // pred_check_branch
      %31 = sbr.rel (0) target = $region33
    $region32: #{tpu_custom_call.1} parent=1 // pred_region
      _
    $region33: #{tpu_custom_call.1} parent=1 // pred_fallthru
      _
    %v32 = vld [vmem:[%s1] sm:$0xff]
    %v33 = vld [vmem:[%s1 + $0x8] sm:$0xff]
    %v34 = vld [vmem:[%s1 + $0x10] sm:$0xff]
    %v35 = vld [vmem:[%s1 + $0x18] sm:$0xff]
    %v36 = vld [vmem:[%s2] sm:$0xff]
    %v37 = vld [vmem:[%s2 + $0x8] sm:$0xff]
    %v38 = vld [vmem:[%s2 + $0x10] sm:$0xff]
    %v39 = vld [vmem:[%s2 + $0x18] sm:$0xff]
    %v40 = vld [vmem:[%s3] sm:$0xff]
    %v41 = vld [vmem:[%s3 + $0x8] sm:$0xff]
    %v42 = vld [vmem:[%s3 + $0x10] sm:$0xff]
    %v43 = vld [vmem:[%s3 + $0x18] sm:$0xff]
    %v44 = vld [vmem:[%s4] sm:$0xff]
    %v45 = vld [vmem:[%s4 + $0x8] sm:$0xff]
    %v46 = vld [vmem:[%s4 + $0x10] sm:$0xff]
    %v47 = vld [vmem:[%s4 + $0x18] sm:$0xff]
    %s48 = scalar_lea.vmem %s4, 32
    %v49 = vld [vmem:[%s48] sm:$0xff]
    %v50 = vld [vmem:[%s48 + $0x8] sm:$0xff]
    %v51 = vld [vmem:[%s48 + $0x10] sm:$0xff]
    %v52 = vld [vmem:[%s48 + $0x18] sm:$0xff]
    %v53 = vld [vmem:[%s5] sm:$0xff]
    %v54 = vld [vmem:[%s5 + $0x8] sm:$0xff]
    %v55 = vld [vmem:[%s5 + $0x10] sm:$0xff]
    %v56 = vld [vmem:[%s5 + $0x18] sm:$0xff]
    %s57 = scalar_lea.vmem %s5, 32
    %v58 = vld [vmem:[%s57] sm:$0xff]
    %v59 = vld [vmem:[%s57 + $0x8] sm:$0xff]
    %v60 = vld [vmem:[%s57 + $0x10] sm:$0xff]
    %v61 = vld [vmem:[%s57 + $0x18] sm:$0xff]
    %v62 = vld [vmem:[%s6] sm:$0xff]
    %v63 = vld [vmem:[%s6 + $0x8] sm:$0xff]
    %v64 = vld [vmem:[%s6 + $0x10] sm:$0xff]
    %v65 = vld [vmem:[%s6 + $0x18] sm:$0xff]
    %v66 = vld [vmem:[#allocation2] sm:$0x1]
    %v67 = vld [vmem:[%s0] sm:$0xf]
    %69 = vset.pattern.permute.xlu0 0
    %70 = vperm.xlu0 %69, %v32
    %v71 = vpop.permute.xlu0 %70
    %74 = vset.pattern.permute.xlu0 0
    %75 = vperm.xlu0 %74, %v33
    %v76 = vpop.permute.xlu0 %75
    %79 = vset.pattern.permute.xlu0 0
    %80 = vperm.xlu0 %79, %v34
    %v81 = vpop.permute.xlu0 %80
    %84 = vset.pattern.permute.xlu0 0
    %85 = vperm.xlu0 %84, %v35
    %v86 = vpop.permute.xlu0 %85
    %v89 = vlaneseq
    %v90 = vshrl.u32 %v89, 7
    %v91 = vsub.s32 0, %v90
    %v92 = vrot.slane %v67, %v91
    %v93 = vlaneseq
    %v94 = vshrl.u32 %v93, 7
    %v95 = vsub.s32 2, %v94
    %v96 = vrot.slane %v67, %v95
    %v99 = vlaneseq
    %v100 = vshrl.u32 %v99, 7
    %v101 = vsub.s32 0, %v100
    %v102 = vrot.slane %v92, %v101
    %v103 = vlaneseq
    %v104 = vshrl.u32 %v103, 7
    %v105 = vsub.s32 0, %v104
    %v106 = vrot.slane %v96, %v105
    %v107 = vmul.f32 %v71, %v102
    %v108 = vmul.f32 %v71, %v106
    %v109 = vmul.f32 %v76, %v102
    %v110 = vmul.f32 %v76, %v106
    %v111 = vmul.f32 %v81, %v102
    %v112 = vmul.f32 %v81, %v106
    %v113 = vmul.f32 %v86, %v102
    %v114 = vmul.f32 %v86, %v106
    %116 = vset.pattern.permute.xlu0 0
    %117 = vperm.xlu0 %116, %v36
    %v118 = vpop.permute.xlu0 %117
    %121 = vset.pattern.permute.xlu0 0
    %122 = vperm.xlu0 %121, %v37
    %v123 = vpop.permute.xlu0 %122
    %126 = vset.pattern.permute.xlu0 0
    %127 = vperm.xlu0 %126, %v38
    %v128 = vpop.permute.xlu0 %127
    %131 = vset.pattern.permute.xlu0 0
    %132 = vperm.xlu0 %131, %v39
    %v133 = vpop.permute.xlu0 %132
    %v135 = vlaneseq
    %v136 = vshrl.u32 %v135, 7
    %v137 = vsub.s32 1, %v136
    %v138 = vrot.slane %v67, %v137
    %v139 = vlaneseq
    %v140 = vshrl.u32 %v139, 7
    %v141 = vsub.s32 3, %v140
    %v142 = vrot.slane %v67, %v141
    %v145 = vlaneseq
    %v146 = vshrl.u32 %v145, 7
    %v147 = vsub.s32 1, %v146
    %v148 = vrot.slane %v138, %v147
    %v149 = vlaneseq
    %v150 = vshrl.u32 %v149, 7
    %v151 = vsub.s32 1, %v150
    %v152 = vrot.slane %v142, %v151
    %v153 = vmul.f32 %v118, %v148
    %v154 = vmul.f32 %v118, %v152
    %v155 = vmul.f32 %v123, %v148
    %v156 = vmul.f32 %v123, %v152
    %v157 = vmul.f32 %v128, %v148
    %v158 = vmul.f32 %v128, %v152
    %v159 = vmul.f32 %v133, %v148
    %v160 = vmul.f32 %v133, %v152
    %v161 = vadd.f32 %v107, %v153
    %v162 = vadd.f32 %v108, %v154
    %v163 = vadd.f32 %v109, %v155
    %v164 = vadd.f32 %v110, %v156
    %v165 = vadd.f32 %v111, %v157
    %v166 = vadd.f32 %v112, %v158
    %v167 = vadd.f32 %v113, %v159
    %v168 = vadd.f32 %v114, %v160
    %170 = vset.pattern.permute.xlu0 0
    %171 = vperm.xlu0 %170, %v40
    %v172 = vpop.permute.xlu0 %171
    %175 = vset.pattern.permute.xlu0 0
    %176 = vperm.xlu0 %175, %v41
    %v177 = vpop.permute.xlu0 %176
    %180 = vset.pattern.permute.xlu0 0
    %181 = vperm.xlu0 %180, %v42
    %v182 = vpop.permute.xlu0 %181
    %185 = vset.pattern.permute.xlu0 0
    %186 = vperm.xlu0 %185, %v43
    %v187 = vpop.permute.xlu0 %186
    %v189 = vadd.f32 %v161, %v172
    %v190 = vadd.f32 %v162, %v172
    %v191 = vadd.f32 %v163, %v177
    %v192 = vadd.f32 %v164, %v177
    %v193 = vadd.f32 %v165, %v182
    %v194 = vadd.f32 %v166, %v182
    %v195 = vadd.f32 %v167, %v187
    %v196 = vadd.f32 %v168, %v187
    %v197 = vmul.f32 %v189, 0.5
    %v198 = vmul.f32 %v190, 0.5
    %v199 = vmul.f32 %v191, 0.5
    %v200 = vmul.f32 %v192, 0.5
    %v201 = vmul.f32 %v193, 0.5
    %v202 = vmul.f32 %v194, 0.5
    %v203 = vmul.f32 %v195, 0.5
    %v204 = vmul.f32 %v196, 0.5
    %v205 = vtanh.pop %v197
    %v206 = vtanh.pop %v198
    %v207 = vtanh.pop %v199
    %v208 = vtanh.pop %v200
    %v209 = vtanh.pop %v201
    %v210 = vtanh.pop %v202
    %v211 = vtanh.pop %v203
    %v212 = vtanh.pop %v204
    %v213 = vadd.f32 %v205, 1.0
    %v214 = vadd.f32 %v206, 1.0
    %v215 = vadd.f32 %v207, 1.0
    %v216 = vadd.f32 %v208, 1.0
    %v217 = vadd.f32 %v209, 1.0
    %v218 = vadd.f32 %v210, 1.0
    %v219 = vadd.f32 %v211, 1.0
    %v220 = vadd.f32 %v212, 1.0
    %v221 = vmul.f32 %v197, %v213
    %v222 = vmul.f32 %v198, %v214
    %v223 = vmul.f32 %v199, %v215
    %v224 = vmul.f32 %v200, %v216
    %v225 = vmul.f32 %v201, %v217
    %v226 = vmul.f32 %v202, %v218
    %v227 = vmul.f32 %v203, %v219
    %v228 = vmul.f32 %v204, %v220
    %230 = vset.pattern.permute.xlu0 0
    %231 = vperm.xlu0 %230, %v53
    %v232 = vpop.permute.xlu0 %231
    %235 = vset.pattern.permute.xlu0 0
    %236 = vperm.xlu0 %235, %v54
    %v237 = vpop.permute.xlu0 %236
    %240 = vset.pattern.permute.xlu0 0
    %241 = vperm.xlu0 %240, %v55
    %v242 = vpop.permute.xlu0 %241
    %245 = vset.pattern.permute.xlu0 0
    %246 = vperm.xlu0 %245, %v56
    %v247 = vpop.permute.xlu0 %246
    %vm249 = vcmask 261120
    %v251 = vsel %vm249, %v44, 0
    %v254 = vsel %vm249, %v45, 0
    %v257 = vsel %vm249, %v46, 0
    %v260 = vsel %vm249, %v47, 0
    %262 = vmatprep.subr.mxu0 %v222
    %263 = vmatpush1.msra.mxu0 %v221
    %264 = vmatprep.subr.mxu0 %v224
    %265 = vmatpush1.msra.mxu0 %v223
    %266 = vmatprep.subr.mxu0 %v226
    %267 = vmatpush1.msra.mxu0 %v225
    %268 = vmatprep.subr.mxu0 %v228
    %269 = vmatpush1.msra.mxu0 %v227
    %270 = vmatprep.subr.mxu0 0.0
    %271 = vmatpush1.msra.mxu0 0.0
    %272 = vmatprep.subr.mxu0 0.0
    %273 = vmatpush1.msra.mxu0 0.0
    %274 = vmatprep.subr.mxu0 0.0
    %275 = vmatpush1.msra.mxu0 0.0
    %276 = vmatprep.subr.mxu0 0.0
    %277 = vmatpush1.msra.mxu0 0.0
    %278 = vmatprep.subr.mxu0 0.0
    %279 = vmatpush1.msra.mxu0 0.0
    %280 = vmatprep.subr.mxu0 0.0
    %281 = vmatpush1.msra.mxu0 0.0
    %282 = vmatprep.subr.mxu0 0.0
    %283 = vmatpush1.msra.mxu0 0.0
    %284 = vmatprep.subr.mxu0 0.0
    %285 = vmatpush1.msra.mxu0 0.0
    %286 = vmatprep.subr.mxu0 0.0
    %287 = vmatpush1.msra.mxu0 0.0
    %288 = vmatprep.subr.mxu0 0.0
    %289 = vmatpush1.msra.mxu0 0.0
    %290 = vmatprep.subr.mxu0 0.0
    %291 = vmatpush1.msra.mxu0 0.0
    %292 = vmatprep.subr.mxu0 0.0
    %293 = vmatpush1.msra.mxu0 0.0
    %294 = vmatprep.subr.mxu0 0.0
    %295 = vmatpush1.msra.mxu0 0.0
    %296 = vmatprep.subr.mxu0 0.0
    %297 = vmatpush1.msra.mxu0 0.0
    %298 = vmatprep.subr.mxu0 0.0
    %299 = vmatpush1.msra.mxu0 0.0
    %300 = vmatprep.subr.mxu0 0.0
    %301 = vmatpush1.msra.mxu0 0.0
    %302 = vmatprep.subr.mxu0 0.0
    %303 = vmatpush1.msra.mxu0 0.0
    %304 = vmatprep.subr.mxu0 0.0
    %305 = vmatpush1.msra.mxu0 0.0
    %306 = vmatprep.subr.mxu0 0.0
    %307 = vmatpush1.msra.mxu0 0.0
    %308 = vmatprep.subr.mxu0 0.0
    %309 = vmatpush1.msra.mxu0 0.0
    %310 = vmatprep.subr.mxu0 0.0
    %311 = vmatpush1.msra.mxu0 0.0
    %312 = vmatprep.subr.mxu0 0.0
    %313 = vmatpush1.msra.mxu0 0.0
    %314 = vmatprep.subr.mxu0 0.0
    %315 = vmatpush1.msra.mxu0 0.0
    %316 = vmatprep.subr.mxu0 0.0
    %317 = vmatpush1.msra.mxu0 0.0
    %318 = vmatprep.subr.mxu0 0.0
    %319 = vmatpush1.msra.mxu0 0.0
    %320 = vmatprep.subr.mxu0 0.0
    %321 = vmatpush1.msra.mxu0 0.0
    %322 = vmatprep.subr.mxu0 0.0
    %323 = vmatpush1.msra.mxu0 0.0
    %324 = vmatprep.subr.mxu0 0.0
    %325 = vmatpush1.msra.mxu0 0.0
    %326 = vmatprep.mubr.f32.mxu0 0.0
    %327 = vmatmul.mubr.f32.gmra.mrb[0].mxu0 %v251
    %v328 = vpop.f32.mrb[0].mxu0
    %v329 = vadd.f32 %v232, %v328
    %v330 = vpop.f32.mrb[0].mxu0
    %v331 = vadd.f32 %v232, %v330
    %332 = vmatprep.mubr.f32.mxu0 0.0
    %333 = vmatmul.mubr.f32.gmra.mrb[0].mxu0 %v254
    %v334 = vpop.f32.mrb[0].mxu0
    %v335 = vadd.f32 %v237, %v334
    %v336 = vpop.f32.mrb[0].mxu0
    %v337 = vadd.f32 %v237, %v336
    %338 = vmatprep.mubr.f32.mxu0 0.0
    %339 = vmatmul.mubr.f32.gmra.mrb[0].mxu0 %v257
    %v340 = vpop.f32.mrb[0].mxu0
    %v341 = vadd.f32 %v242, %v340
    %v342 = vpop.f32.mrb[0].mxu0
    %v343 = vadd.f32 %v242, %v342
    %344 = vmatprep.mubr.f32.mxu0 0.0
    %345 = vmatmul.mubr.f32.gmra.mrb[0].mxu0 %v260
    %v346 = vpop.f32.mrb[0].mxu0
    %v347 = vadd.f32 %v247, %v346
    %v348 = vpop.f32.mrb[0].mxu0
    %v349 = vadd.f32 %v247, %v348
    %350 = vdwg.mxu0
    %v351 = vmul.f32 %v329, 0.5
    %v352 = vmul.f32 %v331, 0.5
    %v353 = vmul.f32 %v335, 0.5
    %v354 = vmul.f32 %v337, 0.5
    %v355 = vmul.f32 %v341, 0.5
    %v356 = vmul.f32 %v343, 0.5
    %v357 = vmul.f32 %v347, 0.5
    %v358 = vmul.f32 %v349, 0.5
    %v359 = vtanh.pop %v351
    %v360 = vtanh.pop %v352
    %v361 = vtanh.pop %v353
    %v362 = vtanh.pop %v354
    %v363 = vtanh.pop %v355
    %v364 = vtanh.pop %v356
    %v365 = vtanh.pop %v357
    %v366 = vtanh.pop %v358
    %v367 = vadd.f32 %v359, 1.0
    %v368 = vadd.f32 %v360, 1.0
    %v369 = vadd.f32 %v361, 1.0
    %v370 = vadd.f32 %v362, 1.0
    %v371 = vadd.f32 %v363, 1.0
    %v372 = vadd.f32 %v364, 1.0
    %v373 = vadd.f32 %v365, 1.0
    %v374 = vadd.f32 %v366, 1.0
    %v375 = vmul.f32 %v351, %v367
    %v376 = vmul.f32 %v352, %v368
    %v377 = vmul.f32 %v353, %v369
    %v378 = vmul.f32 %v354, %v370
    %v379 = vmul.f32 %v355, %v371
    %v380 = vmul.f32 %v356, %v372
    %v381 = vmul.f32 %v357, %v373
    %v382 = vmul.f32 %v358, %v374
    %384 = vset.pattern.permute.xlu0 0
    %385 = vperm.xlu0 %384, %v58
    %v386 = vpop.permute.xlu0 %385
    %389 = vset.pattern.permute.xlu0 0
    %390 = vperm.xlu0 %389, %v59
    %v391 = vpop.permute.xlu0 %390
    %394 = vset.pattern.permute.xlu0 0
    %395 = vperm.xlu0 %394, %v60
    %v396 = vpop.permute.xlu0 %395
    %399 = vset.pattern.permute.xlu0 0
    %400 = vperm.xlu0 %399, %v61
    %v401 = vpop.permute.xlu0 %400
    %v404 = vsel %vm249, %v49, 0
    %v407 = vsel %vm249, %v50, 0
    %v410 = vsel %vm249, %v51, 0
    %v413 = vsel %vm249, %v52, 0
    %415 = vmatprep.subr.mxu0 %v376
    %416 = vmatpush1.msra.mxu0 %v375
    %417 = vmatprep.subr.mxu0 %v378
    %418 = vmatpush1.msra.mxu0 %v377
    %419 = vmatprep.subr.mxu0 %v380
    %420 = vmatpush1.msra.mxu0 %v379
    %421 = vmatprep.subr.mxu0 %v382
    %422 = vmatpush1.msra.mxu0 %v381
    %423 = vmatprep.subr.mxu0 0.0
    %424 = vmatpush1.msra.mxu0 0.0
    %425 = vmatprep.subr.mxu0 0.0
    %426 = vmatpush1.msra.mxu0 0.0
    %427 = vmatprep.subr.mxu0 0.0
    %428 = vmatpush1.msra.mxu0 0.0
    %429 = vmatprep.subr.mxu0 0.0
    %430 = vmatpush1.msra.mxu0 0.0
    %431 = vmatprep.subr.mxu0 0.0
    %432 = vmatpush1.msra.mxu0 0.0
    %433 = vmatprep.subr.mxu0 0.0
    %434 = vmatpush1.msra.mxu0 0.0
    %435 = vmatprep.subr.mxu0 0.0
    %436 = vmatpush1.msra.mxu0 0.0
    %437 = vmatprep.subr.mxu0 0.0
    %438 = vmatpush1.msra.mxu0 0.0
    %439 = vmatprep.subr.mxu0 0.0
    %440 = vmatpush1.msra.mxu0 0.0
    %441 = vmatprep.subr.mxu0 0.0
    %442 = vmatpush1.msra.mxu0 0.0
    %443 = vmatprep.subr.mxu0 0.0
    %444 = vmatpush1.msra.mxu0 0.0
    %445 = vmatprep.subr.mxu0 0.0
    %446 = vmatpush1.msra.mxu0 0.0
    %447 = vmatprep.subr.mxu0 0.0
    %448 = vmatpush1.msra.mxu0 0.0
    %449 = vmatprep.subr.mxu0 0.0
    %450 = vmatpush1.msra.mxu0 0.0
    %451 = vmatprep.subr.mxu0 0.0
    %452 = vmatpush1.msra.mxu0 0.0
    %453 = vmatprep.subr.mxu0 0.0
    %454 = vmatpush1.msra.mxu0 0.0
    %455 = vmatprep.subr.mxu0 0.0
    %456 = vmatpush1.msra.mxu0 0.0
    %457 = vmatprep.subr.mxu0 0.0
    %458 = vmatpush1.msra.mxu0 0.0
    %459 = vmatprep.subr.mxu0 0.0
    %460 = vmatpush1.msra.mxu0 0.0
    %461 = vmatprep.subr.mxu0 0.0
    %462 = vmatpush1.msra.mxu0 0.0
    %463 = vmatprep.subr.mxu0 0.0
    %464 = vmatpush1.msra.mxu0 0.0
    %465 = vmatprep.subr.mxu0 0.0
    %466 = vmatpush1.msra.mxu0 0.0
    %467 = vmatprep.subr.mxu0 0.0
    %468 = vmatpush1.msra.mxu0 0.0
    %469 = vmatprep.subr.mxu0 0.0
    %470 = vmatpush1.msra.mxu0 0.0
    %471 = vmatprep.subr.mxu0 0.0
    %472 = vmatpush1.msra.mxu0 0.0
    %473 = vmatprep.subr.mxu0 0.0
    %474 = vmatpush1.msra.mxu0 0.0
    %475 = vmatprep.subr.mxu0 0.0
    %476 = vmatpush1.msra.mxu0 0.0
    %477 = vmatprep.subr.mxu0 0.0
    %478 = vmatpush1.msra.mxu0 0.0
    %479 = vmatprep.mubr.f32.mxu0 0.0
    %480 = vmatmul.mubr.f32.gmra.mrb[0].mxu0 %v404
    %v481 = vpop.f32.mrb[0].mxu0
    %v482 = vadd.f32 %v386, %v481
    %v483 = vpop.f32.mrb[0].mxu0
    %v484 = vadd.f32 %v386, %v483
    %485 = vmatprep.mubr.f32.mxu0 0.0
    %486 = vmatmul.mubr.f32.gmra.mrb[0].mxu0 %v407
    %v487 = vpop.f32.mrb[0].mxu0
    %v488 = vadd.f32 %v391, %v487
    %v489 = vpop.f32.mrb[0].mxu0
    %v490 = vadd.f32 %v391, %v489
    %491 = vmatprep.mubr.f32.mxu0 0.0
    %492 = vmatmul.mubr.f32.gmra.mrb[0].mxu0 %v410
    %v493 = vpop.f32.mrb[0].mxu0
    %v494 = vadd.f32 %v396, %v493
    %v495 = vpop.f32.mrb[0].mxu0
    %v496 = vadd.f32 %v396, %v495
    %497 = vmatprep.mubr.f32.mxu0 0.0
    %498 = vmatmul.mubr.f32.gmra.mrb[0].mxu0 %v413
    %v499 = vpop.f32.mrb[0].mxu0
    %v500 = vadd.f32 %v401, %v499
    %v501 = vpop.f32.mrb[0].mxu0
    %v502 = vadd.f32 %v401, %v501
    %503 = vdwg.mxu0
    %v504 = vmul.f32 %v482, 0.5
    %v505 = vmul.f32 %v484, 0.5
    %v506 = vmul.f32 %v488, 0.5
    %v507 = vmul.f32 %v490, 0.5
    %v508 = vmul.f32 %v494, 0.5
    %v509 = vmul.f32 %v496, 0.5
    %v510 = vmul.f32 %v500, 0.5
    %v511 = vmul.f32 %v502, 0.5
    %v512 = vtanh.pop %v504
    %v513 = vtanh.pop %v505
    %v514 = vtanh.pop %v506
    %v515 = vtanh.pop %v507
    %v516 = vtanh.pop %v508
    %v517 = vtanh.pop %v509
    %v518 = vtanh.pop %v510
    %v519 = vtanh.pop %v511
    %v520 = vadd.f32 %v512, 1.0
    %v521 = vadd.f32 %v513, 1.0
    %v522 = vadd.f32 %v514, 1.0
    %v523 = vadd.f32 %v515, 1.0
    %v524 = vadd.f32 %v516, 1.0
    %v525 = vadd.f32 %v517, 1.0
    %v526 = vadd.f32 %v518, 1.0
    %v527 = vadd.f32 %v519, 1.0
    %v528 = vmul.f32 %v504, %v520
    %v529 = vmul.f32 %v505, %v521
    %v530 = vmul.f32 %v506, %v522
    %v531 = vmul.f32 %v507, %v523
    %v532 = vmul.f32 %v508, %v524
    %v533 = vmul.f32 %v509, %v525
    %v534 = vmul.f32 %v510, %v526
    %v535 = vmul.f32 %v511, %v527
    %537 = vset.pattern.permute.xlu0 0
    %538 = vperm.xlu0 %537, %v62
    %v539 = vpop.permute.xlu0 %538
    %542 = vset.pattern.permute.xlu0 0
    %543 = vperm.xlu0 %542, %v63
    %v544 = vpop.permute.xlu0 %543
    %547 = vset.pattern.permute.xlu0 0
    %548 = vperm.xlu0 %547, %v64
    %v549 = vpop.permute.xlu0 %548
    %552 = vset.pattern.permute.xlu0 0
    %553 = vperm.xlu0 %552, %v65
    %v554 = vpop.permute.xlu0 %553
    %v556 = vmul.f32 %v539, %v528
    %v557 = vmul.f32 %v539, %v529
    %v558 = vmul.f32 %v544, %v530
    %v559 = vmul.f32 %v544, %v531
    %v560 = vmul.f32 %v549, %v532
    %v561 = vmul.f32 %v549, %v533
    %v562 = vmul.f32 %v554, %v534
    %v563 = vmul.f32 %v554, %v535
    %v564 = vadd.f32 %v556, %v558
    %v565 = vadd.f32 %v564, %v560
    %v566 = vadd.f32 %v565, %v562
    %v567 = vrot.slane %v566, 4
    %v568 = vadd.f32 %v566, %v567
    %v569 = vrot.slane %v568, 2
    %v570 = vadd.f32 %v568, %v569
    %v571 = vrot.slane %v570, 1
    %v572 = vadd.f32 %v570, %v571
    %v573 = vadd.f32 %v557, %v559
    %v574 = vadd.f32 %v573, %v561
    %v575 = vadd.f32 %v574, %v563
    %v576 = vrot.slane %v575, 4
    %v577 = vadd.f32 %v575, %v576
    %v578 = vrot.slane %v577, 2
    %v579 = vadd.f32 %v577, %v578
    %v580 = vrot.slane %v579, 1
    %v581 = vadd.f32 %v579, %v580
    %583 = vset.pattern.permute.xlu0 0
    %584 = vperm.xlu0 %583, %v66
    %v585 = vpop.permute.xlu0 %584
    %v587 = vlaneseq
    %v588 = vshrl.u32 %v587, 7
    %v589 = vsub.s32 0, %v588
    %v590 = vrot.slane %v585, %v589
    %v591 = vadd.f32 %v572, %v590
    %v592 = vadd.f32 %v581, %v590
    %v595 = vcombine.low %v591, %v592
    %v597 = vunpack.c.l.s4 1966171168
    %v598 = vunpack.c.0.s8 %v597
    %v599 = vlaneseq
    %v600 = vshrl.u32 %v599, 7
    %v601 = vsub.s32 %v598, %v600
    %v602 = vrot.slane %v595, %v601
    %v604 = vunpack.c.l.s4 1966171168
    %v605 = vunpack.c.0.s8 %v604
    %v606 = vlaneseq
    %v607 = vshrl.u32 %v606, 7
    %v608 = vsub.s32 %v605, %v607
    %v609 = vrot.slane %v602, %v608
    %v611 = vlaneseq
    %vm612 = vcmp.ge.s32.totalorder %v611, 0
    %vm613 = vcmp.lt.s32.totalorder %v611, 256
    %vm614 = vmand %vm612, %vm613
    %615 = vst.msk [vmem:[#allocation3] sm:$0x3] %vm614, %v609
    // Predicated region
    $region34: #{tpu_custom_call.1} parent=1 // pred_check
      _
    $region35: #{tpu_custom_call.1} parent=1 // pred_check_branch
      %617 = sbr.rel (0) target = $region37
    $region36: #{tpu_custom_call.1} parent=1 // pred_region
      %s619 = ssub.s32 32, 32
      %620 = vsyncadd [#allocation4], %s619
      %s622 = sshll.u32 [#allocation3], 4
      %s623 = int_to_ptr.vmem [resolvable:$true] %s622
      %625 = dma.vmem_to_hbm [thread:$0]  %s623, 32, %s8, [#allocation4]
    $region37: #{tpu_custom_call.1} parent=1 // pred_fallthru
      _
    // Predicated region
    $region38: #{tpu_custom_call.1} parent=1 // pred_check
      _
    $region39: #{tpu_custom_call.1} parent=1 // pred_check_branch
      %627 = sbr.rel (0) target = $region41
    $region40: #{tpu_custom_call.1} parent=1 // pred_region
      %628 = dma.done [#allocation4], 32
    $region41: #{tpu_custom_call.1} parent=1 // pred_fallthru
      _
    %629 = vsyncpa [#allocation4], 1

// kernel: tpu_custom_call.1
$region0: #{tpu_custom_call.1}
  #allocation0 [shape = 'u32[]', space=smem, size = 0x4, offset = 0x4, fixed_abs, tag = 'smem constant byte address 0x4 - core index']
  #allocation1 [shape = 'u32[144,128]{1,0:T(1,128)}', space=vmem, size = 0x12000, scoped, tag = 'internal scratch']
  #allocation2 [shape = 'f32[1,1]{1,0:T(1,128)S(1)}', space=vmem, size = 0x200, scoped, tag = 'scoped memory for tpu_custom_call.1']
  %s0 = inlined_call_operand.vmem [shape: f32[2,256], index: 0, kind: input, shape index: {}]
  %s1 = inlined_call_operand.vmem [shape: f32[32,1], index: 1, kind: input, shape index: {}]
  %s2 = inlined_call_operand.vmem [shape: f32[32,1], index: 2, kind: input, shape index: {}]
  %s3 = inlined_call_operand.vmem [shape: f32[32,1], index: 3, kind: input, shape index: {}]
  %s4 = inlined_call_operand.vmem [shape: f32[2,32,32], index: 4, kind: input, shape index: {}]
  %s5 = inlined_call_operand.vmem [shape: f32[2,32,1], index: 5, kind: input, shape index: {}]
  %s6 = inlined_call_operand.vmem [shape: f32[32,1], index: 6, kind: input, shape index: {}]
  %s7 = inlined_call_operand.<no memory space> [shape: f32[1,1], index: 7, kind: input, shape index: {}]
  %s8 = inlined_call_operand.hbm [shape: f32[1,256], index: 8, kind: output, shape index: {}]
  %s9 = sld [smem:[#allocation0]]
  $region42: #{tpu_custom_call.1} parent=0
    _
  %s11 = ssub.s32 1, %s9
  %s12 = scalar_select 0, %s11, %s9
  %v13 = vstv %s7
  %14 = vst [vmem:[#allocation2] sm:$0x1] %v13
  $region1: #{tpu_custom_call.1} parent=0
    #allocation3 [shape = 'u8[1024]{0}', space=vmem, size = 0x400, scoped, tag = 'output window, operand 0, single buffered']
    #allocation4 [shape = 's32[1]{0}', space=sflag, size = 0x4, scoped, tag = 'scoped memory for tpu_custom_call.1']
    %15 = vsyncpa [#allocation4], 0
    // Predicated region
    $region2: #{tpu_custom_call.1} parent=1 // pred_check
      _
    $region3: #{tpu_custom_call.1} parent=1 // pred_check_branch
      %17 = sbr.rel (0) target = $region5
    $region4: #{tpu_custom_call.1} parent=1 // pred_region
      _
    $region5: #{tpu_custom_call.1} parent=1 // pred_fallthru
      _
    // Predicated region
    $region6: #{tpu_custom_call.1} parent=1 // pred_check
      _
    $region7: #{tpu_custom_call.1} parent=1 // pred_check_branch
      %19 = sbr.rel (0) target = $region9
    $region8: #{tpu_custom_call.1} parent=1 // pred_region
      _
    $region9: #{tpu_custom_call.1} parent=1 // pred_fallthru
      _
    // Predicated region
    $region10: #{tpu_custom_call.1} parent=1 // pred_check
      _
    $region11: #{tpu_custom_call.1} parent=1 // pred_check_branch
      %21 = sbr.rel (0) target = $region13
    $region12: #{tpu_custom_call.1} parent=1 // pred_region
      _
    $region13: #{tpu_custom_call.1} parent=1 // pred_fallthru
      _
    // Predicated region
    $region14: #{tpu_custom_call.1} parent=1 // pred_check
      _
    $region15: #{tpu_custom_call.1} parent=1 // pred_check_branch
      %23 = sbr.rel (0) target = $region17
    $region16: #{tpu_custom_call.1} parent=1 // pred_region
      _
    $region17: #{tpu_custom_call.1} parent=1 // pred_fallthru
      _
    // Predicated region
    $region18: #{tpu_custom_call.1} parent=1 // pred_check
      _
    $region19: #{tpu_custom_call.1} parent=1 // pred_check_branch
      %25 = sbr.rel (0) target = $region21
    $region20: #{tpu_custom_call.1} parent=1 // pred_region
      _
    $region21: #{tpu_custom_call.1} parent=1 // pred_fallthru
      _
    // Predicated region
    $region22: #{tpu_custom_call.1} parent=1 // pred_check
      _
    $region23: #{tpu_custom_call.1} parent=1 // pred_check_branch
      %27 = sbr.rel (0) target = $region25
    $region24: #{tpu_custom_call.1} parent=1 // pred_region
      _
    $region25: #{tpu_custom_call.1} parent=1 // pred_fallthru
      _
    // Predicated region
    $region26: #{tpu_custom_call.1} parent=1 // pred_check
      _
    $region27: #{tpu_custom_call.1} parent=1 // pred_check_branch
      %29 = sbr.rel (0) target = $region29
    $region28: #{tpu_custom_call.1} parent=1 // pred_region
      _
    $region29: #{tpu_custom_call.1} parent=1 // pred_fallthru
      _
    // Predicated region
    $region30: #{tpu_custom_call.1} parent=1 // pred_check
      _
    $region31: #{tpu_custom_call.1} parent=1 // pred_check_branch
      %31 = sbr.rel (0) target = $region33
    $region32: #{tpu_custom_call.1} parent=1 // pred_region
      _
    $region33: #{tpu_custom_call.1} parent=1 // pred_fallthru
      _
    %v32 = vld [vmem:[%s1] sm:$0xff]
    %v33 = vld [vmem:[%s1 + $0x8] sm:$0xff]
    %v34 = vld [vmem:[%s1 + $0x10] sm:$0xff]
    %v35 = vld [vmem:[%s1 + $0x18] sm:$0xff]
    %v36 = vld [vmem:[%s2] sm:$0xff]
    %v37 = vld [vmem:[%s2 + $0x8] sm:$0xff]
    %v38 = vld [vmem:[%s2 + $0x10] sm:$0xff]
    %v39 = vld [vmem:[%s2 + $0x18] sm:$0xff]
    %v40 = vld [vmem:[%s3] sm:$0xff]
    %v41 = vld [vmem:[%s3 + $0x8] sm:$0xff]
    %v42 = vld [vmem:[%s3 + $0x10] sm:$0xff]
    %v43 = vld [vmem:[%s3 + $0x18] sm:$0xff]
    %v44 = vld [vmem:[%s4] sm:$0xff]
    %v45 = vld [vmem:[%s4 + $0x8] sm:$0xff]
    %v46 = vld [vmem:[%s4 + $0x10] sm:$0xff]
    %v47 = vld [vmem:[%s4 + $0x18] sm:$0xff]
    %s48 = scalar_lea.vmem %s4, 32
    %v49 = vld [vmem:[%s48] sm:$0xff]
    %v50 = vld [vmem:[%s48 + $0x8] sm:$0xff]
    %v51 = vld [vmem:[%s48 + $0x10] sm:$0xff]
    %v52 = vld [vmem:[%s48 + $0x18] sm:$0xff]
    %v53 = vld [vmem:[%s5] sm:$0xff]
    %v54 = vld [vmem:[%s5 + $0x8] sm:$0xff]
    %v55 = vld [vmem:[%s5 + $0x10] sm:$0xff]
    %v56 = vld [vmem:[%s5 + $0x18] sm:$0xff]
    %s57 = scalar_lea.vmem %s5, 32
    %v58 = vld [vmem:[%s57] sm:$0xff]
    %v59 = vld [vmem:[%s57 + $0x8] sm:$0xff]
    %v60 = vld [vmem:[%s57 + $0x10] sm:$0xff]
    %v61 = vld [vmem:[%s57 + $0x18] sm:$0xff]
    %v62 = vld [vmem:[%s6] sm:$0xff]
    %v63 = vld [vmem:[%s6 + $0x8] sm:$0xff]
    %v64 = vld [vmem:[%s6 + $0x10] sm:$0xff]
    %v65 = vld [vmem:[%s6 + $0x18] sm:$0xff]
    %v66 = vld [vmem:[#allocation2] sm:$0x1]
    %v67 = vld [vmem:[%s0] sm:$0xf]
    %69 = vset.pattern.permute.xlu0 0
    %70 = vperm.xlu0 %69, %v32
    %v71 = vpop.permute.xlu0 %70
    %74 = vset.pattern.permute.xlu0 0
    %75 = vperm.xlu0 %74, %v33
    %v76 = vpop.permute.xlu0 %75
    %79 = vset.pattern.permute.xlu0 0
    %80 = vperm.xlu0 %79, %v34
    %v81 = vpop.permute.xlu0 %80
    %84 = vset.pattern.permute.xlu0 0
    %85 = vperm.xlu0 %84, %v35
    %v86 = vpop.permute.xlu0 %85
    %v89 = vlaneseq
    %v90 = vshrl.u32 %v89, 7
    %v91 = vsub.s32 0, %v90
    %v92 = vrot.slane %v67, %v91
    %v93 = vlaneseq
    %v94 = vshrl.u32 %v93, 7
    %v95 = vsub.s32 2, %v94
    %v96 = vrot.slane %v67, %v95
    %v99 = vlaneseq
    %v100 = vshrl.u32 %v99, 7
    %v101 = vsub.s32 0, %v100
    %v102 = vrot.slane %v92, %v101
    %v103 = vlaneseq
    %v104 = vshrl.u32 %v103, 7
    %v105 = vsub.s32 0, %v104
    %v106 = vrot.slane %v96, %v105
    %v107 = vmul.f32 %v71, %v102
    %v108 = vmul.f32 %v71, %v106
    %v109 = vmul.f32 %v76, %v102
    %v110 = vmul.f32 %v76, %v106
    %v111 = vmul.f32 %v81, %v102
    %v112 = vmul.f32 %v81, %v106
    %v113 = vmul.f32 %v86, %v102
    %v114 = vmul.f32 %v86, %v106
    %116 = vset.pattern.permute.xlu0 0
    %117 = vperm.xlu0 %116, %v36
    %v118 = vpop.permute.xlu0 %117
    %121 = vset.pattern.permute.xlu0 0
    %122 = vperm.xlu0 %121, %v37
    %v123 = vpop.permute.xlu0 %122
    %126 = vset.pattern.permute.xlu0 0
    %127 = vperm.xlu0 %126, %v38
    %v128 = vpop.permute.xlu0 %127
    %131 = vset.pattern.permute.xlu0 0
    %132 = vperm.xlu0 %131, %v39
    %v133 = vpop.permute.xlu0 %132
    %v135 = vlaneseq
    %v136 = vshrl.u32 %v135, 7
    %v137 = vsub.s32 1, %v136
    %v138 = vrot.slane %v67, %v137
    %v139 = vlaneseq
    %v140 = vshrl.u32 %v139, 7
    %v141 = vsub.s32 3, %v140
    %v142 = vrot.slane %v67, %v141
    %v145 = vlaneseq
    %v146 = vshrl.u32 %v145, 7
    %v147 = vsub.s32 1, %v146
    %v148 = vrot.slane %v138, %v147
    %v149 = vlaneseq
    %v150 = vshrl.u32 %v149, 7
    %v151 = vsub.s32 1, %v150
    %v152 = vrot.slane %v142, %v151
    %v153 = vmul.f32 %v118, %v148
    %v154 = vmul.f32 %v118, %v152
    %v155 = vmul.f32 %v123, %v148
    %v156 = vmul.f32 %v123, %v152
    %v157 = vmul.f32 %v128, %v148
    %v158 = vmul.f32 %v128, %v152
    %v159 = vmul.f32 %v133, %v148
    %v160 = vmul.f32 %v133, %v152
    %v161 = vadd.f32 %v107, %v153
    %v162 = vadd.f32 %v108, %v154
    %v163 = vadd.f32 %v109, %v155
    %v164 = vadd.f32 %v110, %v156
    %v165 = vadd.f32 %v111, %v157
    %v166 = vadd.f32 %v112, %v158
    %v167 = vadd.f32 %v113, %v159
    %v168 = vadd.f32 %v114, %v160
    %170 = vset.pattern.permute.xlu0 0
    %171 = vperm.xlu0 %170, %v40
    %v172 = vpop.permute.xlu0 %171
    %175 = vset.pattern.permute.xlu0 0
    %176 = vperm.xlu0 %175, %v41
    %v177 = vpop.permute.xlu0 %176
    %180 = vset.pattern.permute.xlu0 0
    %181 = vperm.xlu0 %180, %v42
    %v182 = vpop.permute.xlu0 %181
    %185 = vset.pattern.permute.xlu0 0
    %186 = vperm.xlu0 %185, %v43
    %v187 = vpop.permute.xlu0 %186
    %v189 = vadd.f32 %v161, %v172
    %v190 = vadd.f32 %v162, %v172
    %v191 = vadd.f32 %v163, %v177
    %v192 = vadd.f32 %v164, %v177
    %v193 = vadd.f32 %v165, %v182
    %v194 = vadd.f32 %v166, %v182
    %v195 = vadd.f32 %v167, %v187
    %v196 = vadd.f32 %v168, %v187
    %v197 = vmul.f32 %v189, 0.5
    %v198 = vmul.f32 %v190, 0.5
    %v199 = vmul.f32 %v191, 0.5
    %v200 = vmul.f32 %v192, 0.5
    %v201 = vmul.f32 %v193, 0.5
    %v202 = vmul.f32 %v194, 0.5
    %v203 = vmul.f32 %v195, 0.5
    %v204 = vmul.f32 %v196, 0.5
    %v205 = vtanh.pop %v197
    %v206 = vtanh.pop %v198
    %v207 = vtanh.pop %v199
    %v208 = vtanh.pop %v200
    %v209 = vtanh.pop %v201
    %v210 = vtanh.pop %v202
    %v211 = vtanh.pop %v203
    %v212 = vtanh.pop %v204
    %v213 = vadd.f32 %v205, 1.0
    %v214 = vadd.f32 %v206, 1.0
    %v215 = vadd.f32 %v207, 1.0
    %v216 = vadd.f32 %v208, 1.0
    %v217 = vadd.f32 %v209, 1.0
    %v218 = vadd.f32 %v210, 1.0
    %v219 = vadd.f32 %v211, 1.0
    %v220 = vadd.f32 %v212, 1.0
    %v221 = vmul.f32 %v197, %v213
    %v222 = vmul.f32 %v198, %v214
    %v223 = vmul.f32 %v199, %v215
    %v224 = vmul.f32 %v200, %v216
    %v225 = vmul.f32 %v201, %v217
    %v226 = vmul.f32 %v202, %v218
    %v227 = vmul.f32 %v203, %v219
    %v228 = vmul.f32 %v204, %v220
    %230 = vset.pattern.permute.xlu0 0
    %231 = vperm.xlu0 %230, %v53
    %v232 = vpop.permute.xlu0 %231
    %235 = vset.pattern.permute.xlu0 0
    %236 = vperm.xlu0 %235, %v54
    %v237 = vpop.permute.xlu0 %236
    %240 = vset.pattern.permute.xlu0 0
    %241 = vperm.xlu0 %240, %v55
    %v242 = vpop.permute.xlu0 %241
    %245 = vset.pattern.permute.xlu0 0
    %246 = vperm.xlu0 %245, %v56
    %v247 = vpop.permute.xlu0 %246
    %vm249 = vcmask 261120
    %v251 = vsel %vm249, %v44, 0
    %v254 = vsel %vm249, %v45, 0
    %v257 = vsel %vm249, %v46, 0
    %v260 = vsel %vm249, %v47, 0
    %262 = vmatprep.subr.mxu0 %v222
    %263 = vmatpush1.msra.mxu0 %v221
    %264 = vmatprep.subr.mxu0 %v224
    %265 = vmatpush1.msra.mxu0 %v223
    %266 = vmatprep.subr.mxu0 %v226
    %267 = vmatpush1.msra.mxu0 %v225
    %268 = vmatprep.subr.mxu0 %v228
    %269 = vmatpush1.msra.mxu0 %v227
    %270 = vmatprep.subr.mxu0 0.0
    %271 = vmatpush1.msra.mxu0 0.0
    %272 = vmatprep.subr.mxu0 0.0
    %273 = vmatpush1.msra.mxu0 0.0
    %274 = vmatprep.subr.mxu0 0.0
    %275 = vmatpush1.msra.mxu0 0.0
    %276 = vmatprep.subr.mxu0 0.0
    %277 = vmatpush1.msra.mxu0 0.0
    %278 = vmatprep.subr.mxu0 0.0
    %279 = vmatpush1.msra.mxu0 0.0
    %280 = vmatprep.subr.mxu0 0.0
    %281 = vmatpush1.msra.mxu0 0.0
    %282 = vmatprep.subr.mxu0 0.0
    %283 = vmatpush1.msra.mxu0 0.0
    %284 = vmatprep.subr.mxu0 0.0
    %285 = vmatpush1.msra.mxu0 0.0
    %286 = vmatprep.subr.mxu0 0.0
    %287 = vmatpush1.msra.mxu0 0.0
    %288 = vmatprep.subr.mxu0 0.0
    %289 = vmatpush1.msra.mxu0 0.0
    %290 = vmatprep.subr.mxu0 0.0
    %291 = vmatpush1.msra.mxu0 0.0
    %292 = vmatprep.subr.mxu0 0.0
    %293 = vmatpush1.msra.mxu0 0.0
    %294 = vmatprep.subr.mxu0 0.0
    %295 = vmatpush1.msra.mxu0 0.0
    %296 = vmatprep.subr.mxu0 0.0
    %297 = vmatpush1.msra.mxu0 0.0
    %298 = vmatprep.subr.mxu0 0.0
    %299 = vmatpush1.msra.mxu0 0.0
    %300 = vmatprep.subr.mxu0 0.0
    %301 = vmatpush1.msra.mxu0 0.0
    %302 = vmatprep.subr.mxu0 0.0
    %303 = vmatpush1.msra.mxu0 0.0
    %304 = vmatprep.subr.mxu0 0.0
    %305 = vmatpush1.msra.mxu0 0.0
    %306 = vmatprep.subr.mxu0 0.0
    %307 = vmatpush1.msra.mxu0 0.0
    %308 = vmatprep.subr.mxu0 0.0
    %309 = vmatpush1.msra.mxu0 0.0
    %310 = vmatprep.subr.mxu0 0.0
    %311 = vmatpush1.msra.mxu0 0.0
    %312 = vmatprep.subr.mxu0 0.0
    %313 = vmatpush1.msra.mxu0 0.0
    %314 = vmatprep.subr.mxu0 0.0
    %315 = vmatpush1.msra.mxu0 0.0
    %316 = vmatprep.subr.mxu0 0.0
    %317 = vmatpush1.msra.mxu0 0.0
    %318 = vmatprep.subr.mxu0 0.0
    %319 = vmatpush1.msra.mxu0 0.0
    %320 = vmatprep.subr.mxu0 0.0
    %321 = vmatpush1.msra.mxu0 0.0
    %322 = vmatprep.subr.mxu0 0.0
    %323 = vmatpush1.msra.mxu0 0.0
    %324 = vmatprep.subr.mxu0 0.0
    %325 = vmatpush1.msra.mxu0 0.0
    %326 = vmatprep.mubr.f32.mxu0 0.0
    %327 = vmatmul.mubr.f32.gmra.mrb[0].mxu0 %v251
    %v328 = vpop.f32.mrb[0].mxu0
    %v329 = vadd.f32 %v232, %v328
    %v330 = vpop.f32.mrb[0].mxu0
    %v331 = vadd.f32 %v232, %v330
    %332 = vmatprep.mubr.f32.mxu0 0.0
    %333 = vmatmul.mubr.f32.gmra.mrb[0].mxu0 %v254
    %v334 = vpop.f32.mrb[0].mxu0
    %v335 = vadd.f32 %v237, %v334
    %v336 = vpop.f32.mrb[0].mxu0
    %v337 = vadd.f32 %v237, %v336
    %338 = vmatprep.mubr.f32.mxu0 0.0
    %339 = vmatmul.mubr.f32.gmra.mrb[0].mxu0 %v257
    %v340 = vpop.f32.mrb[0].mxu0
    %v341 = vadd.f32 %v242, %v340
    %v342 = vpop.f32.mrb[0].mxu0
    %v343 = vadd.f32 %v242, %v342
    %344 = vmatprep.mubr.f32.mxu0 0.0
    %345 = vmatmul.mubr.f32.gmra.mrb[0].mxu0 %v260
    %v346 = vpop.f32.mrb[0].mxu0
    %v347 = vadd.f32 %v247, %v346
    %v348 = vpop.f32.mrb[0].mxu0
    %v349 = vadd.f32 %v247, %v348
    %350 = vdwg.mxu0
    %v351 = vmul.f32 %v329, 0.5
    %v352 = vmul.f32 %v331, 0.5
    %v353 = vmul.f32 %v335, 0.5
    %v354 = vmul.f32 %v337, 0.5
    %v355 = vmul.f32 %v341, 0.5
    %v356 = vmul.f32 %v343, 0.5
    %v357 = vmul.f32 %v347, 0.5
    %v358 = vmul.f32 %v349, 0.5
    %v359 = vtanh.pop %v351
    %v360 = vtanh.pop %v352
    %v361 = vtanh.pop %v353
    %v362 = vtanh.pop %v354
    %v363 = vtanh.pop %v355
    %v364 = vtanh.pop %v356
    %v365 = vtanh.pop %v357
    %v366 = vtanh.pop %v358
    %v367 = vadd.f32 %v359, 1.0
    %v368 = vadd.f32 %v360, 1.0
    %v369 = vadd.f32 %v361, 1.0
    %v370 = vadd.f32 %v362, 1.0
    %v371 = vadd.f32 %v363, 1.0
    %v372 = vadd.f32 %v364, 1.0
    %v373 = vadd.f32 %v365, 1.0
    %v374 = vadd.f32 %v366, 1.0
    %v375 = vmul.f32 %v351, %v367
    %v376 = vmul.f32 %v352, %v368
    %v377 = vmul.f32 %v353, %v369
    %v378 = vmul.f32 %v354, %v370
    %v379 = vmul.f32 %v355, %v371
    %v380 = vmul.f32 %v356, %v372
    %v381 = vmul.f32 %v357, %v373
    %v382 = vmul.f32 %v358, %v374
    %384 = vset.pattern.permute.xlu0 0
    %385 = vperm.xlu0 %384, %v58
    %v386 = vpop.permute.xlu0 %385
    %389 = vset.pattern.permute.xlu0 0
    %390 = vperm.xlu0 %389, %v59
    %v391 = vpop.permute.xlu0 %390
    %394 = vset.pattern.permute.xlu0 0
    %395 = vperm.xlu0 %394, %v60
    %v396 = vpop.permute.xlu0 %395
    %399 = vset.pattern.permute.xlu0 0
    %400 = vperm.xlu0 %399, %v61
    %v401 = vpop.permute.xlu0 %400
    %v404 = vsel %vm249, %v49, 0
    %v407 = vsel %vm249, %v50, 0
    %v410 = vsel %vm249, %v51, 0
    %v413 = vsel %vm249, %v52, 0
    %415 = vmatprep.subr.mxu0 %v376
    %416 = vmatpush1.msra.mxu0 %v375
    %417 = vmatprep.subr.mxu0 %v378
    %418 = vmatpush1.msra.mxu0 %v377
    %419 = vmatprep.subr.mxu0 %v380
    %420 = vmatpush1.msra.mxu0 %v379
    %421 = vmatprep.subr.mxu0 %v382
    %422 = vmatpush1.msra.mxu0 %v381
    %423 = vmatprep.subr.mxu0 0.0
    %424 = vmatpush1.msra.mxu0 0.0
    %425 = vmatprep.subr.mxu0 0.0
    %426 = vmatpush1.msra.mxu0 0.0
    %427 = vmatprep.subr.mxu0 0.0
    %428 = vmatpush1.msra.mxu0 0.0
    %429 = vmatprep.subr.mxu0 0.0
    %430 = vmatpush1.msra.mxu0 0.0
    %431 = vmatprep.subr.mxu0 0.0
    %432 = vmatpush1.msra.mxu0 0.0
    %433 = vmatprep.subr.mxu0 0.0
    %434 = vmatpush1.msra.mxu0 0.0
    %435 = vmatprep.subr.mxu0 0.0
    %436 = vmatpush1.msra.mxu0 0.0
    %437 = vmatprep.subr.mxu0 0.0
    %438 = vmatpush1.msra.mxu0 0.0
    %439 = vmatprep.subr.mxu0 0.0
    %440 = vmatpush1.msra.mxu0 0.0
    %441 = vmatprep.subr.mxu0 0.0
    %442 = vmatpush1.msra.mxu0 0.0
    %443 = vmatprep.subr.mxu0 0.0
    %444 = vmatpush1.msra.mxu0 0.0
    %445 = vmatprep.subr.mxu0 0.0
    %446 = vmatpush1.msra.mxu0 0.0
    %447 = vmatprep.subr.mxu0 0.0
    %448 = vmatpush1.msra.mxu0 0.0
    %449 = vmatprep.subr.mxu0 0.0
    %450 = vmatpush1.msra.mxu0 0.0
    %451 = vmatprep.subr.mxu0 0.0
    %452 = vmatpush1.msra.mxu0 0.0
    %453 = vmatprep.subr.mxu0 0.0
    %454 = vmatpush1.msra.mxu0 0.0
    %455 = vmatprep.subr.mxu0 0.0
    %456 = vmatpush1.msra.mxu0 0.0
    %457 = vmatprep.subr.mxu0 0.0
    %458 = vmatpush1.msra.mxu0 0.0
    %459 = vmatprep.subr.mxu0 0.0
    %460 = vmatpush1.msra.mxu0 0.0
    %461 = vmatprep.subr.mxu0 0.0
    %462 = vmatpush1.msra.mxu0 0.0
    %463 = vmatprep.subr.mxu0 0.0
    %464 = vmatpush1.msra.mxu0 0.0
    %465 = vmatprep.subr.mxu0 0.0
    %466 = vmatpush1.msra.mxu0 0.0
    %467 = vmatprep.subr.mxu0 0.0
    %468 = vmatpush1.msra.mxu0 0.0
    %469 = vmatprep.subr.mxu0 0.0
    %470 = vmatpush1.msra.mxu0 0.0
    %471 = vmatprep.subr.mxu0 0.0
    %472 = vmatpush1.msra.mxu0 0.0
    %473 = vmatprep.subr.mxu0 0.0
    %474 = vmatpush1.msra.mxu0 0.0
    %475 = vmatprep.subr.mxu0 0.0
    %476 = vmatpush1.msra.mxu0 0.0
    %477 = vmatprep.subr.mxu0 0.0
    %478 = vmatpush1.msra.mxu0 0.0
    %479 = vmatprep.mubr.f32.mxu0 0.0
    %480 = vmatmul.mubr.f32.gmra.mrb[0].mxu0 %v404
    %v481 = vpop.f32.mrb[0].mxu0
    %v482 = vadd.f32 %v386, %v481
    %v483 = vpop.f32.mrb[0].mxu0
    %v484 = vadd.f32 %v386, %v483
    %485 = vmatprep.mubr.f32.mxu0 0.0
    %486 = vmatmul.mubr.f32.gmra.mrb[0].mxu0 %v407
    %v487 = vpop.f32.mrb[0].mxu0
    %v488 = vadd.f32 %v391, %v487
    %v489 = vpop.f32.mrb[0].mxu0
    %v490 = vadd.f32 %v391, %v489
    %491 = vmatprep.mubr.f32.mxu0 0.0
    %492 = vmatmul.mubr.f32.gmra.mrb[0].mxu0 %v410
    %v493 = vpop.f32.mrb[0].mxu0
    %v494 = vadd.f32 %v396, %v493
    %v495 = vpop.f32.mrb[0].mxu0
    %v496 = vadd.f32 %v396, %v495
    %497 = vmatprep.mubr.f32.mxu0 0.0
    %498 = vmatmul.mubr.f32.gmra.mrb[0].mxu0 %v413
    %v499 = vpop.f32.mrb[0].mxu0
    %v500 = vadd.f32 %v401, %v499
    %v501 = vpop.f32.mrb[0].mxu0
    %v502 = vadd.f32 %v401, %v501
    %503 = vdwg.mxu0
    %v504 = vmul.f32 %v482, 0.5
    %v505 = vmul.f32 %v484, 0.5
    %v506 = vmul.f32 %v488, 0.5
    %v507 = vmul.f32 %v490, 0.5
    %v508 = vmul.f32 %v494, 0.5
    %v509 = vmul.f32 %v496, 0.5
    %v510 = vmul.f32 %v500, 0.5
    %v511 = vmul.f32 %v502, 0.5
    %v512 = vtanh.pop %v504
    %v513 = vtanh.pop %v505
    %v514 = vtanh.pop %v506
    %v515 = vtanh.pop %v507
    %v516 = vtanh.pop %v508
    %v517 = vtanh.pop %v509
    %v518 = vtanh.pop %v510
    %v519 = vtanh.pop %v511
    %v520 = vadd.f32 %v512, 1.0
    %v521 = vadd.f32 %v513, 1.0
    %v522 = vadd.f32 %v514, 1.0
    %v523 = vadd.f32 %v515, 1.0
    %v524 = vadd.f32 %v516, 1.0
    %v525 = vadd.f32 %v517, 1.0
    %v526 = vadd.f32 %v518, 1.0
    %v527 = vadd.f32 %v519, 1.0
    %v528 = vmul.f32 %v504, %v520
    %v529 = vmul.f32 %v505, %v521
    %v530 = vmul.f32 %v506, %v522
    %v531 = vmul.f32 %v507, %v523
    %v532 = vmul.f32 %v508, %v524
    %v533 = vmul.f32 %v509, %v525
    %v534 = vmul.f32 %v510, %v526
    %v535 = vmul.f32 %v511, %v527
    %537 = vset.pattern.permute.xlu0 0
    %538 = vperm.xlu0 %537, %v62
    %v539 = vpop.permute.xlu0 %538
    %542 = vset.pattern.permute.xlu0 0
    %543 = vperm.xlu0 %542, %v63
    %v544 = vpop.permute.xlu0 %543
    %547 = vset.pattern.permute.xlu0 0
    %548 = vperm.xlu0 %547, %v64
    %v549 = vpop.permute.xlu0 %548
    %552 = vset.pattern.permute.xlu0 0
    %553 = vperm.xlu0 %552, %v65
    %v554 = vpop.permute.xlu0 %553
    %v556 = vmul.f32 %v539, %v528
    %v557 = vmul.f32 %v539, %v529
    %v558 = vmul.f32 %v544, %v530
    %v559 = vmul.f32 %v544, %v531
    %v560 = vmul.f32 %v549, %v532
    %v561 = vmul.f32 %v549, %v533
    %v562 = vmul.f32 %v554, %v534
    %v563 = vmul.f32 %v554, %v535
    %v564 = vadd.f32 %v556, %v558
    %v565 = vadd.f32 %v564, %v560
    %v566 = vadd.f32 %v565, %v562
    %v567 = vrot.slane %v566, 4
    %v568 = vadd.f32 %v566, %v567
    %v569 = vrot.slane %v568, 2
    %v570 = vadd.f32 %v568, %v569
    %v571 = vrot.slane %v570, 1
    %v572 = vadd.f32 %v570, %v571
    %v573 = vadd.f32 %v557, %v559
    %v574 = vadd.f32 %v573, %v561
    %v575 = vadd.f32 %v574, %v563
    %v576 = vrot.slane %v575, 4
    %v577 = vadd.f32 %v575, %v576
    %v578 = vrot.slane %v577, 2
    %v579 = vadd.f32 %v577, %v578
    %v580 = vrot.slane %v579, 1
    %v581 = vadd.f32 %v579, %v580
    %583 = vset.pattern.permute.xlu0 0
    %584 = vperm.xlu0 %583, %v66
    %v585 = vpop.permute.xlu0 %584
    %v587 = vlaneseq
    %v588 = vshrl.u32 %v587, 7
    %v589 = vsub.s32 0, %v588
    %v590 = vrot.slane %v585, %v589
    %v591 = vadd.f32 %v572, %v590
    %v592 = vadd.f32 %v581, %v590
    %v595 = vcombine.low %v591, %v592
    %v597 = vunpack.c.l.s4 1966171168
    %v598 = vunpack.c.0.s8 %v597
    %v599 = vlaneseq
    %v600 = vshrl.u32 %v599, 7
    %v601 = vsub.s32 %v598, %v600
    %v602 = vrot.slane %v595, %v601
    %v604 = vunpack.c.l.s4 1966171168
    %v605 = vunpack.c.0.s8 %v604
    %v606 = vlaneseq
    %v607 = vshrl.u32 %v606, 7
    %v608 = vsub.s32 %v605, %v607
    %v609 = vrot.slane %v602, %v608
    %v611 = vlaneseq
    %vm612 = vcmp.ge.s32.totalorder %v611, 0
    %vm613 = vcmp.lt.s32.totalorder %v611, 256
    %vm614 = vmand %vm612, %vm613
    %615 = vst.msk [vmem:[#allocation3] sm:$0x3] %vm614, %v609
    // Predicated region
    $region34: #{tpu_custom_call.1} parent=1 // pred_check
      _
    $region35: #{tpu_custom_call.1} parent=1 // pred_check_branch
      %617 = sbr.rel (0) target = $region37
    $region36: #{tpu_custom_call.1} parent=1 // pred_region
      %s619 = ssub.s32 32, 32
      %620 = vsyncadd [#allocation4], %s619
      %s622 = sshll.u32 [#allocation3], 4
      %s623 = int_to_ptr.vmem [resolvable:$true] %s622
      %625 = dma.vmem_to_hbm [thread:$0]  %s623, 32, %s8, [#allocation4]
    $region37: #{tpu_custom_call.1} parent=1 // pred_fallthru
      _
    // Predicated region
    $region38: #{tpu_custom_call.1} parent=1 // pred_check
      _
    $region39: #{tpu_custom_call.1} parent=1 // pred_check_branch
      %627 = sbr.rel (0) target = $region41
    $region40: #{tpu_custom_call.1} parent=1 // pred_region
      %628 = dma.done [#allocation4], 32
    $region41: #{tpu_custom_call.1} parent=1 // pred_fallthru
      _
    %629 = vsyncpa [#allocation4], 1

</llo_original>
